<compile_context>
chip_gen: v7x
topology: tpu7x:2x2x1
jax: 0.10.0
libtpu: 0.0.40
codegen_flags: <defaults>
</compile_context>

<pallas_src>
import functools

import jax
import jax.numpy as jnp
from jax import lax
from jax.experimental import pallas as pl
from jax.experimental.pallas import tpu as pltpu


def _round_up(x, m):
    return (x + m - 1) // m * m


def _hw_vmem_bytes():
    """Best-effort per-core VMEM capacity; conservative 64 MiB fallback (v7x)."""
    try:
        info = pltpu.get_tpu_info()
    except Exception:
        return 64 << 20
    for attr in ("vmem_capacity_bytes", "vmem_bytes", "vmem_size_bytes"):
        v = getattr(info, attr, None)
        if isinstance(v, (int, float)) and v > 0:
            return int(v)
    return 64 << 20


def _cosine_classifier_kernel(feat_ref, w_ref, g_ref, raw_ref, logits_ref, *,
                              scaling, cita, nbit, gamma):
    f = feat_ref[...].astype(jnp.float32)                     # (TB, D)

    # features = scaling * F.normalize(features, p=2, dim=-1)
    # multiply-by-rsqrt keeps the divide off the VPU critical path (EUP slot).
    f_sumsq = jnp.sum(f * f, axis=-1, keepdims=True)
    f_n = (scaling * f) * lax.rsqrt(jnp.maximum(f_sumsq, 1e-24))

    # q_fea = quan_a(features, cita, nbit): clamp to [0, cita], round to the
    # (2**nbit - 1)-level grid.  Scale factors are Python constants.
    scale = (2.0 ** nbit) - 1.0
    scale_cita = scale / cita
    inv_scale_cita = cita / scale
    out1 = 0.5 * (jnp.abs(f_n) - jnp.abs(f_n - cita) + cita)
    q_fea = jnp.round(out1 * scale_cita) * inv_scale_cita

    # TODO(synk): FC_STE_FN (learned weight-quantization path) is not defined
    # in the reference source; quantized weights == normalized weights here.

    # raw = -stable_cosine_distance(q, w) = -max(|q|^2 + |w|^2 - 2 q.w, 0).
    # |w_n|^2 == scaling**2 by construction (rows L2-normalized then scaled;
    # assumes no all-zero weight row).
    mxu_dtype = w_ref.dtype
    dots = lax.dot_general(q_fea.astype(mxu_dtype), w_ref[...],
                           (((1,), (0,)), ((), ())),
                           preferred_element_type=jnp.float32)   # (TB, P_pad)
    a_sq = jnp.sum(q_fea * q_fea, axis=-1, keepdims=True)        # (TB, 1)
    raw = -jnp.maximum(a_sq + scaling * scaling - 2.0 * dots, 0.0)
    raw_ref[...] = raw.astype(raw_ref.dtype)                     # lane-dense store

    # _reduce_proxies(merging='softmax') as an indicator-matrix segment-sum:
    #   logits[:, c] = sum_{p in c} raw*e / sum_{p in c} e,
    #   e = exp(gamma*raw - rowmax).
    # The row max is shared across all groups, which is valid because softmax
    # is shift-invariant per group; padded proxy rows of G are zero so they
    # never contribute to num/den.
    gr = gamma * raw
    m = jnp.max(gr, axis=-1, keepdims=True)
    e = jnp.exp(gr - m)                                          # (TB, P_pad)
    g = g_ref[...]                                               # (P_pad, C_pad)
    num = lax.dot_general((raw * e).astype(g.dtype), g,
                          (((1,), (0,)), ((), ())),
                          preferred_element_type=jnp.float32)    # (TB, C_pad)
    den = lax.dot_general(e.astype(g.dtype), g,
                          (((1,), (0,)), ((), ())),
                          preferred_element_type=jnp.float32)
    # +eps keeps padded class columns (den == 0) at exactly 0 instead of NaN.
    logits_ref[...] = (num * pl.reciprocal(den + 1e-30, approx=True)
                       ).astype(logits_ref.dtype)                # lane-dense store


def cosine_classifier_forward(features, weights, *, scaling=1.0, cita=2.0,
                              nbit=8, gamma=1.0, proxy_per_class=10,
                              block_b=None, mxu_dtype=jnp.bfloat16,
                              raw_dtype=jnp.float32):
    features = jnp.asarray(features, jnp.float32)
    weights = jnp.asarray(weights, jnp.float32)
    B, D = features.shape
    P, D2 = weights.shape
    assert D == D2 and P % proxy_per_class == 0
    n_classes = P // proxy_per_class

    # Hoisted + done once in the wrapper: weights = scaling * normalize(w),
    # cast to the MXU dtype and transposed to (D, P_pad) so the 128-aligned
    # proxy dim is the lane dim and the matmul RHS has the canonical (K, N)
    # layout.  Padded proxy rows are zero.
    w_norm = jnp.sqrt(jnp.sum(weights * weights, axis=-1, keepdims=True))
    w_n = scaling * weights / jnp.maximum(w_norm, 1e-12)
    p_pad = _round_up(P, 128)
    c_pad = _round_up(n_classes, 128)
    w_t = jnp.pad(w_n, ((0, p_pad - P), (0, 0))).T.astype(mxu_dtype)  # (D, P_pad)

    # Resident 0/1 group indicator: G[p, c] = 1 iff proxy p belongs to class c.
    # Padded proxy rows / padded class columns are all zero.
    p_idx = jnp.arange(p_pad)[:, None]
    c_idx = jnp.arange(c_pad)[None, :]
    g_mat = (((p_idx // proxy_per_class) == c_idx) & (p_idx < P)).astype(mxu_dtype)

    # Batch tile: MXU-row aligned (bf16 packs 16 rows per sublane-packed vreg),
    # default 256 on v6e/v7x (2x256 MXU), 128 on v5e (4x128 MXU), shrunk to fit
    # the VMEM budget if needed.
    align = 16 if jnp.dtype(mxu_dtype) == jnp.dtype(jnp.bfloat16) else 8
    if block_b is None:
        try:
            kind = jax.devices()[0].device_kind.lower()
        except Exception:
            kind = ""
        block_b = 128 if "v5" in kind else 256
    tb = min(_round_up(B, align), _round_up(block_b, align))

    hw_vmem = _hw_vmem_bytes()
    itm = jnp.dtype(mxu_dtype).itemsize
    ritm = jnp.dtype(raw_dtype).itemsize

    def est_vmem(t):
        io = (2 * t * D * 4                   # features tile (double-buffered)
              + D * p_pad * itm               # resident weights (single-buffered)
              + p_pad * c_pad * itm           # resident indicator (single-buffered)
              + 2 * t * p_pad * ritm          # raw_logits tile (double-buffered)
              + 2 * t * c_pad * 4)            # logits tile (double-buffered)
        temps = t * (4 * D + 4 * p_pad + 3 * c_pad) * 4   # in-kernel f32 temps
        return io + temps

    budget = int(0.85 * hw_vmem)              # leave compiler scratch headroom
    while tb > align and est_vmem(tb) > budget:
        tb = max(align, _round_up(tb // 2, align))
    # TODO(synk): if the resident (D, P_pad) weights alone exceed the budget
    # (production P*D on v7x's 64 MiB), add a P grid axis
    # (grid=(B/TB, P/TP), 'arbitrary') accumulating rowmax/e and the
    # indicator-matmul num/den in VMEM scratch with pl.when init/finalize.

    b_pad = _round_up(B, tb)
    feat = jnp.pad(features, ((0, b_pad - B), (0, 0)))

    kernel = functools.partial(
        _cosine_classifier_kernel, scaling=float(scaling), cita=float(cita),
        nbit=int(nbit), gamma=float(gamma))

    vmem_limit = int(min(max(2 * est_vmem(tb), 4 << 20), budget))

    def call(single_buffer_resident):
        resident = (dict(pipeline_mode=pl.Buffered(1))
                    if single_buffer_resident else {})
        return pl.pallas_call(
            kernel,
            out_shape=(jax.ShapeDtypeStruct((b_pad, p_pad), raw_dtype),
                       jax.ShapeDtypeStruct((b_pad, c_pad), jnp.float32)),
            grid=(b_pad // tb,),
            in_specs=[pl.BlockSpec((tb, D), lambda i: (i, 0)),
                      pl.BlockSpec((D, p_pad), lambda i: (0, 0), **resident),
                      pl.BlockSpec((p_pad, c_pad), lambda i: (0, 0), **resident)],
            out_specs=(pl.BlockSpec((tb, p_pad), lambda i: (i, 0)),
                       pl.BlockSpec((tb, c_pad), lambda i: (i, 0))),
            compiler_params=pltpu.CompilerParams(
                dimension_semantics=("parallel",),
                vmem_limit_bytes=vmem_limit),
        )(feat, w_t, g_mat)

    try:
        raw_pad, logits_pad = call(True)      # single-buffer resident blocks
    except Exception:
        # TODO(synk): pl.Buffered(1) unsupported on this jax version; fall back
        # to default double-buffering of the resident weight/indicator blocks.
        raw_pad, logits_pad = call(False)

    return {"logits": logits_pad[:B, :n_classes],
            "raw_logits": raw_pad[:B, :P]}


def _ref_forward(features, weights, *, scaling, cita, nbit, gamma, ppc):
    """Pure-JAX reference of the PyTorch forward (for correctness check)."""
    f = scaling * features / jnp.maximum(
        jnp.linalg.norm(features, axis=-1, keepdims=True), 1e-12)
    sc = ((2 ** nbit) - 1) / cita
    out1 = 0.5 * (jnp.abs(f) - jnp.abs(f - cita) + cita)
    q = jnp.round(out1 * sc) / sc
    w = scaling * weights / jnp.maximum(
        jnp.linalg.norm(weights, axis=-1, keepdims=True), 1e-12)
    dist = jnp.maximum(
        jnp.sum(q * q, -1)[:, None] + jnp.sum(w * w, -1)[None, :]
        - 2.0 * jnp.dot(q, w.T, precision=lax.Precision.HIGHEST), 0.0)
    raw = -dist
    B, P = raw.shape
    s = raw.reshape(B, P // ppc, ppc)
    att = jax.nn.softmax(gamma * s, axis=-1)
    return raw, jnp.sum(s * att, axis=-1)


if __name__ == "__main__":
    # Hyperparameters mirroring the module defaults.
    features_dim = 32
    proxy_per_class = 10
    n_classes = 4
    batch = 12                      # deliberately not a multiple of the batch tile
    scaling, gamma, cita, bit = 1.0, 1.0, 2.0, 8

    key = jax.random.PRNGKey(0)
    kf, kw = jax.random.split(key)
    features = jax.random.normal(kf, (batch, features_dim), dtype=jnp.float32)
    # add_classes uses kaiming_normal_(nonlinearity='relu'): std = sqrt(2/fan_in)
    weights = jax.random.normal(
        kw, (n_classes * proxy_per_class, features_dim),
        dtype=jnp.float32) * jnp.sqrt(2.0 / features_dim)

    raw_ref, logits_ref = _ref_forward(
        features, weights, scaling=scaling, cita=cita, nbit=bit,
        gamma=gamma, ppc=proxy_per_class)

    # f32-MXU path (block_b=8 -> grid of 2 batch tiles + padded batch rows).
    # Tolerances account for the approximate EUP reciprocal and the 8-bit
    # quantization grid (a 1-ulp normalization difference can flip a round()).
    out32 = cosine_classifier_forward(
        features, weights, scaling=scaling, cita=cita, nbit=bit, gamma=gamma,
        proxy_per_class=proxy_per_class, block_b=8, mxu_dtype=jnp.float32)
    jax.block_until_ready(out32)
    assert out32["raw_logits"].shape == (batch, n_classes * proxy_per_class)
    assert out32["logits"].shape == (batch, n_classes)
    assert jnp.allclose(out32["raw_logits"], raw_ref, atol=2e-2, rtol=2e-2)
    assert jnp.allclose(out32["logits"], logits_ref, atol=2e-2, rtol=2e-2)

    # Default perf configuration: bf16 MXU operands + bf16 raw_logits store
    # (halves the dominant HBM write-back traffic); looser tolerance.
    out_bf16 = cosine_classifier_forward(
        features, weights, scaling=scaling, cita=cita, nbit=bit, gamma=gamma,
        proxy_per_class=proxy_per_class, raw_dtype=jnp.bfloat16)
    jax.block_until_ready(out_bf16)
    assert out_bf16["raw_logits"].shape == (batch, n_classes * proxy_per_class)
    assert out_bf16["logits"].shape == (batch, n_classes)
    assert jnp.allclose(out_bf16["raw_logits"].astype(jnp.float32), raw_ref,
                        atol=5e-2, rtol=5e-2)
    assert jnp.allclose(out_bf16["logits"], logits_ref, atol=5e-2, rtol=5e-2)

    print("KERNEL_OK")
</pallas_src>

<mosaic_0001>
module attributes {stable_mosaic.version = 11 : i64} {
  func.func @_cosine_classifier_kernel(%arg0: i32, %arg1: memref<8x32xf32, #tpu.memory_space<vmem>>, %arg2: memref<32x128xf32, #tpu.memory_space<vmem>>, %arg3: memref<128x128xf32, #tpu.memory_space<vmem>>, %arg4: memref<8x128xf32, #tpu.memory_space<vmem>>, %arg5: memref<8x128xf32, #tpu.memory_space<vmem>>) attributes {dimension_semantics = [#tpu.dimension_semantics<parallel>], iteration_bounds = array<i64: 2>, scalar_prefetch = 0 : i64, scratch_operands = 0 : i64, tpu.core_type = #tpu.core_type<tc>, window_params = [{transform_indices = @transform_0, window_bounds = array<i64: 8, 32>}, {pipeline_mode = #tpu.pipeline_mode<synchronous>, transform_indices = @transform_1, window_bounds = array<i64: 32, 128>}, {pipeline_mode = #tpu.pipeline_mode<synchronous>, transform_indices = @transform_2, window_bounds = array<i64: 128, 128>}, {transform_indices = @transform_3, window_bounds = array<i64: 8, 128>}, {transform_indices = @transform_4, window_bounds = array<i64: 8, 128>}]} {
    %c0 = arith.constant 0 : index
    %c0_0 = arith.constant 0 : index
    %0 = vector.load %arg1[%c0, %c0_0] : memref<8x32xf32, #tpu.memory_space<vmem>>, vector<8x32xf32>
    %1 = arith.mulf %0, %0 : vector<8x32xf32>
    %cst = arith.constant dense<0.000000e+00> : vector<8xf32>
    %2 = vector.multi_reduction <add>, %1, %cst [1] : vector<8x32xf32> to vector<8xf32>
    %3 = vector.shape_cast %2 : vector<8xf32> to vector<8x1xf32>
    %cst_1 = arith.constant 1.000000e+00 : f32
    %4 = vector.broadcast %cst_1 : f32 to vector<8x32xf32>
    %5 = arith.mulf %4, %0 : vector<8x32xf32>
    %cst_2 = arith.constant 1.000000e-24 : f32
    %6 = vector.broadcast %cst_2 : f32 to vector<8x1xf32>
    %7 = arith.maximumf %3, %6 : vector<8x1xf32>
    %8 = math.rsqrt %7 : vector<8x1xf32>
    %9 = vector.broadcast %8 : vector<8x1xf32> to vector<8x32xf32>
    %10 = arith.mulf %5, %9 : vector<8x32xf32>
    %11 = math.absf %10 : vector<8x32xf32>
    %cst_3 = arith.constant 2.000000e+00 : f32
    %12 = vector.broadcast %cst_3 : f32 to vector<8x32xf32>
    %13 = arith.subf %10, %12 : vector<8x32xf32>
    %14 = math.absf %13 : vector<8x32xf32>
    %15 = arith.subf %11, %14 : vector<8x32xf32>
    %cst_4 = arith.constant 2.000000e+00 : f32
    %16 = vector.broadcast %cst_4 : f32 to vector<8x32xf32>
    %17 = arith.addf %15, %16 : vector<8x32xf32>
    %cst_5 = arith.constant 5.000000e-01 : f32
    %18 = vector.broadcast %cst_5 : f32 to vector<8x32xf32>
    %19 = arith.mulf %18, %17 : vector<8x32xf32>
    %cst_6 = arith.constant 1.275000e+02 : f32
    %20 = vector.broadcast %cst_6 : f32 to vector<8x32xf32>
    %21 = arith.mulf %19, %20 : vector<8x32xf32>
    %22 = math.roundeven %21 : vector<8x32xf32>
    %cst_7 = arith.constant 0.00784313772 : f32
    %23 = vector.broadcast %cst_7 : f32 to vector<8x32xf32>
    %24 = arith.mulf %22, %23 : vector<8x32xf32>
    %c0_8 = arith.constant 0 : index
    %c0_9 = arith.constant 0 : index
    %25 = vector.load %arg2[%c0_8, %c0_9] : memref<32x128xf32, #tpu.memory_space<vmem>>, vector<32x128xf32>
    %cst_10 = arith.constant dense<0.000000e+00> : vector<8x128xf32>
    %26 = tpu.matmul %24, %25, %cst_10 {dimension_numbers = #tpu.dot_dimension_numbers<[1], [0], [0], [1], [0, 0, 1, 1], [], []>} : vector<8x32xf32>, vector<32x128xf32>, vector<8x128xf32> -> vector<8x128xf32>
    %27 = arith.mulf %24, %24 : vector<8x32xf32>
    %cst_11 = arith.constant dense<0.000000e+00> : vector<8xf32>
    %28 = vector.multi_reduction <add>, %27, %cst_11 [1] : vector<8x32xf32> to vector<8xf32>
    %29 = vector.shape_cast %28 : vector<8xf32> to vector<8x1xf32>
    %cst_12 = arith.constant 1.000000e+00 : f32
    %30 = vector.broadcast %cst_12 : f32 to vector<8x1xf32>
    %31 = arith.addf %29, %30 : vector<8x1xf32>
    %cst_13 = arith.constant 2.000000e+00 : f32
    %32 = vector.broadcast %cst_13 : f32 to vector<8x128xf32>
    %33 = arith.mulf %32, %26 : vector<8x128xf32>
    %34 = vector.broadcast %31 : vector<8x1xf32> to vector<8x128xf32>
    %35 = arith.subf %34, %33 : vector<8x128xf32>
    %cst_14 = arith.constant 0.000000e+00 : f32
    %36 = vector.broadcast %cst_14 : f32 to vector<8x128xf32>
    %37 = arith.maximumf %35, %36 : vector<8x128xf32>
    %cst_15 = arith.constant 0.000000e+00 : f32
    %38 = vector.broadcast %cst_15 : f32 to vector<8x128xf32>
    %39 = arith.subf %38, %37 : vector<8x128xf32>
    %c0_16 = arith.constant 0 : index
    %c0_17 = arith.constant 0 : index
    %40 = vector.load %arg4[%c0_16, %c0_17] : memref<8x128xf32, #tpu.memory_space<vmem>>, vector<8x128xf32>
    tpu.vector_store %arg4[%c0_16, %c0_17], %39 {strides = array<i32>} : memref<8x128xf32, #tpu.memory_space<vmem>>, vector<8x128xf32>,
    %cst_18 = arith.constant 1.000000e+00 : f32
    %41 = vector.broadcast %cst_18 : f32 to vector<8x128xf32>
    %42 = arith.mulf %41, %39 : vector<8x128xf32>
    %cst_19 = arith.constant dense<0xFF800000> : vector<8xf32>
    %43 = vector.multi_reduction <maximumf>, %42, %cst_19 [1] : vector<8x128xf32> to vector<8xf32>
    %44 = vector.shape_cast %43 : vector<8xf32> to vector<8x1xf32>
    %45 = vector.broadcast %44 : vector<8x1xf32> to vector<8x128xf32>
    %46 = arith.subf %42, %45 : vector<8x128xf32>
    %47 = math.exp %46 : vector<8x128xf32>
    %c0_20 = arith.constant 0 : index
    %c0_21 = arith.constant 0 : index
    %48 = vector.load %arg3[%c0_20, %c0_21] : memref<128x128xf32, #tpu.memory_space<vmem>>, vector<128x128xf32>
    %49 = arith.mulf %39, %47 : vector<8x128xf32>
    %cst_22 = arith.constant dense<0.000000e+00> : vector<8x128xf32>
    %50 = tpu.matmul %49, %48, %cst_22 {dimension_numbers = #tpu.dot_dimension_numbers<[1], [0], [0], [1], [0, 0, 1, 1], [], []>} : vector<8x128xf32>, vector<128x128xf32>, vector<8x128xf32> -> vector<8x128xf32>
    %cst_23 = arith.constant dense<0.000000e+00> : vector<8x128xf32>
    %51 = tpu.matmul %47, %48, %cst_23 {dimension_numbers = #tpu.dot_dimension_numbers<[1], [0], [0], [1], [0, 0, 1, 1], [], []>} : vector<8x128xf32>, vector<128x128xf32>, vector<8x128xf32> -> vector<8x128xf32>
    %cst_24 = arith.constant 1.000000e-30 : f32
    %52 = vector.broadcast %cst_24 : f32 to vector<8x128xf32>
    %53 = arith.addf %51, %52 : vector<8x128xf32>
    %54 = tpu.reciprocal %53 {approx = true} : vector<8x128xf32> -> vector<8x128xf32>
    %55 = arith.mulf %50, %54 : vector<8x128xf32>
    %c0_25 = arith.constant 0 : index
    %c0_26 = arith.constant 0 : index
    %56 = vector.load %arg5[%c0_25, %c0_26] : memref<8x128xf32, #tpu.memory_space<vmem>>, vector<8x128xf32>
    tpu.vector_store %arg5[%c0_25, %c0_26], %55 {strides = array<i32>} : memref<8x128xf32, #tpu.memory_space<vmem>>, vector<8x128xf32>,
    return
  }
  func.func @transform_0(%arg0: i32) -> (i32, i32) {
    %c0_i32 = arith.constant 0 : i32
    %c0_i32_0 = arith.constant 0 : i32
    return %arg0, %c0_i32 : i32, i32
  }
  func.func @transform_1(%arg0: i32) -> (i32, i32) {
    %c0_i32 = arith.constant 0 : i32
    %c0_i32_0 = arith.constant 0 : i32
    %c0_i32_1 = arith.constant 0 : i32
    return %c0_i32, %c0_i32_0 : i32, i32
  }
  func.func @transform_2(%arg0: i32) -> (i32, i32) {
    %c0_i32 = arith.constant 0 : i32
    %c0_i32_0 = arith.constant 0 : i32
    %c0_i32_1 = arith.constant 0 : i32
    return %c0_i32, %c0_i32_0 : i32, i32
  }
  func.func @transform_3(%arg0: i32) -> (i32, i32) {
    %c0_i32 = arith.constant 0 : i32
    %c0_i32_0 = arith.constant 0 : i32
    return %arg0, %c0_i32 : i32, i32
  }
  func.func @transform_4(%arg0: i32) -> (i32, i32) {
    %c0_i32 = arith.constant 0 : i32
    %c0_i32_0 = arith.constant 0 : i32
    return %arg0, %c0_i32 : i32, i32
  }
}

module attributes {stable_mosaic.version = 11 : i64} {
  func.func @_cosine_classifier_kernel(%arg0: i32, %arg1: memref<8x32xf32, #tpu.memory_space<vmem>>, %arg2: memref<32x128xf32, #tpu.memory_space<vmem>>, %arg3: memref<128x128xf32, #tpu.memory_space<vmem>>, %arg4: memref<8x128xf32, #tpu.memory_space<vmem>>, %arg5: memref<8x128xf32, #tpu.memory_space<vmem>>) attributes {dimension_semantics = [#tpu.dimension_semantics<parallel>], iteration_bounds = array<i64: 2>, scalar_prefetch = 0 : i64, scratch_operands = 0 : i64, tpu.core_type = #tpu.core_type<tc>, window_params = [{transform_indices = @transform_0, window_bounds = array<i64: 8, 32>}, {pipeline_mode = #tpu.pipeline_mode<synchronous>, transform_indices = @transform_1, window_bounds = array<i64: 32, 128>}, {pipeline_mode = #tpu.pipeline_mode<synchronous>, transform_indices = @transform_2, window_bounds = array<i64: 128, 128>}, {transform_indices = @transform_3, window_bounds = array<i64: 8, 128>}, {transform_indices = @transform_4, window_bounds = array<i64: 8, 128>}]} {
    %c0 = arith.constant 0 : index
    %c0_0 = arith.constant 0 : index
    %0 = vector.load %arg1[%c0, %c0_0] : memref<8x32xf32, #tpu.memory_space<vmem>>, vector<8x32xf32>
    %1 = arith.mulf %0, %0 : vector<8x32xf32>
    %cst = arith.constant dense<0.000000e+00> : vector<8xf32>
    %2 = vector.multi_reduction <add>, %1, %cst [1] : vector<8x32xf32> to vector<8xf32>
    %3 = vector.shape_cast %2 : vector<8xf32> to vector<8x1xf32>
    %cst_1 = arith.constant 1.000000e+00 : f32
    %4 = vector.broadcast %cst_1 : f32 to vector<8x32xf32>
    %5 = arith.mulf %4, %0 : vector<8x32xf32>
    %cst_2 = arith.constant 1.000000e-24 : f32
    %6 = vector.broadcast %cst_2 : f32 to vector<8x1xf32>
    %7 = arith.maximumf %3, %6 : vector<8x1xf32>
    %8 = math.rsqrt %7 : vector<8x1xf32>
    %9 = vector.broadcast %8 : vector<8x1xf32> to vector<8x32xf32>
    %10 = arith.mulf %5, %9 : vector<8x32xf32>
    %11 = math.absf %10 : vector<8x32xf32>
    %cst_3 = arith.constant 2.000000e+00 : f32
    %12 = vector.broadcast %cst_3 : f32 to vector<8x32xf32>
    %13 = arith.subf %10, %12 : vector<8x32xf32>
    %14 = math.absf %13 : vector<8x32xf32>
    %15 = arith.subf %11, %14 : vector<8x32xf32>
    %cst_4 = arith.constant 2.000000e+00 : f32
    %16 = vector.broadcast %cst_4 : f32 to vector<8x32xf32>
    %17 = arith.addf %15, %16 : vector<8x32xf32>
    %cst_5 = arith.constant 5.000000e-01 : f32
    %18 = vector.broadcast %cst_5 : f32 to vector<8x32xf32>
    %19 = arith.mulf %18, %17 : vector<8x32xf32>
    %cst_6 = arith.constant 1.275000e+02 : f32
    %20 = vector.broadcast %cst_6 : f32 to vector<8x32xf32>
    %21 = arith.mulf %19, %20 : vector<8x32xf32>
    %22 = math.roundeven %21 : vector<8x32xf32>
    %cst_7 = arith.constant 0.00784313772 : f32
    %23 = vector.broadcast %cst_7 : f32 to vector<8x32xf32>
    %24 = arith.mulf %22, %23 : vector<8x32xf32>
    %c0_8 = arith.constant 0 : index
    %c0_9 = arith.constant 0 : index
    %25 = vector.load %arg2[%c0_8, %c0_9] : memref<32x128xf32, #tpu.memory_space<vmem>>, vector<32x128xf32>
    %cst_10 = arith.constant dense<0.000000e+00> : vector<8x128xf32>
    %26 = tpu.matmul %24, %25, %cst_10 {dimension_numbers = #tpu.dot_dimension_numbers<[1], [0], [0], [1], [0, 0, 1, 1], [], []>} : vector<8x32xf32>, vector<32x128xf32>, vector<8x128xf32> -> vector<8x128xf32>
    %27 = arith.mulf %24, %24 : vector<8x32xf32>
    %cst_11 = arith.constant dense<0.000000e+00> : vector<8xf32>
    %28 = vector.multi_reduction <add>, %27, %cst_11 [1] : vector<8x32xf32> to vector<8xf32>
    %29 = vector.shape_cast %28 : vector<8xf32> to vector<8x1xf32>
    %cst_12 = arith.constant 1.000000e+00 : f32
    %30 = vector.broadcast %cst_12 : f32 to vector<8x1xf32>
    %31 = arith.addf %29, %30 : vector<8x1xf32>
    %cst_13 = arith.constant 2.000000e+00 : f32
    %32 = vector.broadcast %cst_13 : f32 to vector<8x128xf32>
    %33 = arith.mulf %32, %26 : vector<8x128xf32>
    %34 = vector.broadcast %31 : vector<8x1xf32> to vector<8x128xf32>
    %35 = arith.subf %34, %33 : vector<8x128xf32>
    %cst_14 = arith.constant 0.000000e+00 : f32
    %36 = vector.broadcast %cst_14 : f32 to vector<8x128xf32>
    %37 = arith.maximumf %35, %36 : vector<8x128xf32>
    %cst_15 = arith.constant 0.000000e+00 : f32
    %38 = vector.broadcast %cst_15 : f32 to vector<8x128xf32>
    %39 = arith.subf %38, %37 : vector<8x128xf32>
    %c0_16 = arith.constant 0 : index
    %c0_17 = arith.constant 0 : index
    %40 = vector.load %arg4[%c0_16, %c0_17] : memref<8x128xf32, #tpu.memory_space<vmem>>, vector<8x128xf32>
    tpu.vector_store %arg4[%c0_16, %c0_17], %39 {strides = array<i32>} : memref<8x128xf32, #tpu.memory_space<vmem>>, vector<8x128xf32>,
    %cst_18 = arith.constant 1.000000e+00 : f32
    %41 = vector.broadcast %cst_18 : f32 to vector<8x128xf32>
    %42 = arith.mulf %41, %39 : vector<8x128xf32>
    %cst_19 = arith.constant dense<0xFF800000> : vector<8xf32>
    %43 = vector.multi_reduction <maximumf>, %42, %cst_19 [1] : vector<8x128xf32> to vector<8xf32>
    %44 = vector.shape_cast %43 : vector<8xf32> to vector<8x1xf32>
    %45 = vector.broadcast %44 : vector<8x1xf32> to vector<8x128xf32>
    %46 = arith.subf %42, %45 : vector<8x128xf32>
    %47 = math.exp %46 : vector<8x128xf32>
    %c0_20 = arith.constant 0 : index
    %c0_21 = arith.constant 0 : index
    %48 = vector.load %arg3[%c0_20, %c0_21] : memref<128x128xf32, #tpu.memory_space<vmem>>, vector<128x128xf32>
    %49 = arith.mulf %39, %47 : vector<8x128xf32>
    %cst_22 = arith.constant dense<0.000000e+00> : vector<8x128xf32>
    %50 = tpu.matmul %49, %48, %cst_22 {dimension_numbers = #tpu.dot_dimension_numbers<[1], [0], [0], [1], [0, 0, 1, 1], [], []>} : vector<8x128xf32>, vector<128x128xf32>, vector<8x128xf32> -> vector<8x128xf32>
    %cst_23 = arith.constant dense<0.000000e+00> : vector<8x128xf32>
    %51 = tpu.matmul %47, %48, %cst_23 {dimension_numbers = #tpu.dot_dimension_numbers<[1], [0], [0], [1], [0, 0, 1, 1], [], []>} : vector<8x128xf32>, vector<128x128xf32>, vector<8x128xf32> -> vector<8x128xf32>
    %cst_24 = arith.constant 1.000000e-30 : f32
    %52 = vector.broadcast %cst_24 : f32 to vector<8x128xf32>
    %53 = arith.addf %51, %52 : vector<8x128xf32>
    %54 = tpu.reciprocal %53 {approx = true} : vector<8x128xf32> -> vector<8x128xf32>
    %55 = arith.mulf %50, %54 : vector<8x128xf32>
    %c0_25 = arith.constant 0 : index
    %c0_26 = arith.constant 0 : index
    %56 = vector.load %arg5[%c0_25, %c0_26] : memref<8x128xf32, #tpu.memory_space<vmem>>, vector<8x128xf32>
    tpu.vector_store %arg5[%c0_25, %c0_26], %55 {strides = array<i32>} : memref<8x128xf32, #tpu.memory_space<vmem>>, vector<8x128xf32>,
    return
  }
  func.func @transform_0(%arg0: i32) -> (i32, i32) {
    %c0_i32 = arith.constant 0 : i32
    %c0_i32_0 = arith.constant 0 : i32
    return %arg0, %c0_i32 : i32, i32
  }
  func.func @transform_1(%arg0: i32) -> (i32, i32) {
    %c0_i32 = arith.constant 0 : i32
    %c0_i32_0 = arith.constant 0 : i32
    %c0_i32_1 = arith.constant 0 : i32
    return %c0_i32, %c0_i32_0 : i32, i32
  }
  func.func @transform_2(%arg0: i32) -> (i32, i32) {
    %c0_i32 = arith.constant 0 : i32
    %c0_i32_0 = arith.constant 0 : i32
    %c0_i32_1 = arith.constant 0 : i32
    return %c0_i32, %c0_i32_0 : i32, i32
  }
  func.func @transform_3(%arg0: i32) -> (i32, i32) {
    %c0_i32 = arith.constant 0 : i32
    %c0_i32_0 = arith.constant 0 : i32
    return %arg0, %c0_i32 : i32, i32
  }
  func.func @transform_4(%arg0: i32) -> (i32, i32) {
    %c0_i32 = arith.constant 0 : i32
    %c0_i32_0 = arith.constant 0 : i32
    return %arg0, %c0_i32 : i32, i32
  }
}

</mosaic_0001>

<llo_original>
// kernel: tpu_custom_call.1
$region0: #{tpu_custom_call.1}
  #allocation0 [shape = 'u32[]', space=smem, size = 0x4, offset = 0x4, fixed_abs, tag = 'smem constant byte address 0x4 - core index']
  #allocation1 [shape = 'u32[144,128]{1,0:T(1,128)}', space=vmem, size = 0x12000, scoped, tag = 'internal scratch']
  %s0 = inlined_call_operand.hbm [shape: f32[16,32], index: 0, kind: input, shape index: {}]
  %s1 = inlined_call_operand.hbm [shape: f32[32,128], index: 1, kind: input, shape index: {}]
  %s2 = inlined_call_operand.hbm [shape: f32[128,128], index: 2, kind: input, shape index: {}]
  %s3 = inlined_call_operand.hbm [shape: f32[16,128], index: 3, kind: output, shape index: {0}]
  %s4 = inlined_call_operand.hbm [shape: f32[16,128], index: 4, kind: output, shape index: {1}]
  %5 = xla_tuple %s3, %s4
  %s6 = sld [smem:[#allocation0]]
  $region65: #{tpu_custom_call.1} parent=0
    _
  %s8 = ssub.s32 1, %s6
  %s9 = scalar_select 0, %s8, %s6
  $region1: #{tpu_custom_call.1} parent=0
    #allocation2 [shape = 'u8[8192]{0}', space=vmem, size = 0x2000, scoped, tag = 'input window, operand 0']
    #allocation3 [shape = 's32[2]{0}', space=sflag, size = 0x8, scoped, tag = 'scoped memory for tpu_custom_call.1']
    #allocation4 [shape = 's32[2]{0}', space=sflag, size = 0x8, scoped, tag = 'scoped memory for tpu_custom_call.1']
    #allocation5 [shape = 'u8[16384]{0}', space=vmem, size = 0x4000, scoped, tag = 'input window, operand 1, single buffered']
    #allocation6 [shape = 's32[1]{0}', space=sflag, size = 0x4, scoped, tag = 'scoped memory for tpu_custom_call.1']
    #allocation7 [shape = 'u8[65536]{0}', space=vmem, size = 0x10000, scoped, tag = 'input window, operand 2, single buffered']
    #allocation8 [shape = 'u8[8192]{0}', space=vmem, size = 0x2000, scoped, tag = 'output window, operand 0']
    #allocation9 [shape = 'u8[8192]{0}', space=vmem, size = 0x2000, scoped, tag = 'output window, operand 1']
    #allocation10 [shape = 's32[2]{0}', space=sflag, size = 0x8, scoped, tag = 'scoped memory for tpu_custom_call.1']
    %10 = vsyncpa [#allocation3], 0
    %s11 = scalar_lea.sflag [#allocation3], 1
    %12 = vsyncpa %s11, 0
    %13 = vsyncpa [#allocation6], 0
    %14 = vsyncpa [#allocation4], 0
    %s15 = scalar_lea.sflag [#allocation4], 1
    %16 = vsyncpa %s15, 0
    %17 = vsyncpa [#allocation10], 0
    %s18 = scalar_lea.sflag [#allocation10], 1
    %19 = vsyncpa %s18, 0
    loop: start=0, step=1, limit=4
    $region2: #{tpu_custom_call.1} parent=1 // loop_pre_header
      _
    $region3: #{tpu_custom_call.1} parent=1 // loop_header
      %s21 = sphi 0, %s25
      %p22 = scmp.ge.s32.totalorder %s21, 4
      %s31 = sphi 0, %s33
      %s34 = sphi 0, %s31
      %s35 = sphi 0, %s34
      %s51 = sphi 0, %s35
      %s55 = sphi 0, %s55
      %s57 = sphi 0, %s55
      %s58 = sphi 0, %s57
      %s72 = sphi 0, %s58
      %s76 = sphi 0, %s76
      %s78 = sphi 0, %s76
      %s79 = sphi 0, %s78
      %s93 = sphi 0, %s79
      %s99 = sphi 0, %s101
      %s102 = sphi 0, %s99
      %s103 = sphi 0, %s102
      %s119 = sphi 0, %s103
      %s125 = sphi 0, %s127
      %s128 = sphi 0, %s125
      %s129 = sphi 0, %s128
      %s145 = sphi 0, %s129
    $region4: #{tpu_custom_call.1} parent=1 // loop_header_branch
      %24 = sbr.rel (%p22) target = $region8
    $region5: #{tpu_custom_call.1} parent=1 // loop_body
      %s26 = ssub.s32 %s21, 1
      %s27 = ssub.s32 %s21, 2
      %s28 = sadd.s32 %s21, 1
      %s29 = ssub.s32 %s21, %s28
      %p30 = scmp.eq.s32.totalorder %s29, 0
      %s32 = sadd.s32 %s31, 1
      %s33 = scalar_select %p30, %s31, %s32
      %p36 = pneg %p30
      %p37 = scmp.eq.s32.totalorder %s21, 1
      %p38 = por %p36, %p37
      %p39 = scmp.ne.s32.totalorder %s31, %s34
      %p40 = scmp.eq.s32.totalorder %s21, 0
      %p41 = por %p39, %p40
      %p42 = scmp.ne.s32.totalorder %s31, %s34
      %p43 = scmp.eq.s32.totalorder %s26, 1
      %p44 = por %p42, %p43
      %p45 = scmp.ne.s32.totalorder %s34, %s35
      %p46 = scmp.eq.s32.totalorder %s26, 0
      %p47 = por %p45, %p46
      %p48 = scmp.ne.s32.totalorder %s34, %s35
      %p49 = scmp.eq.s32.totalorder %s27, 1
      %p50 = por %p48, %p49
      %p52 = scmp.ne.s32.totalorder %s35, %s51
      %p53 = scmp.eq.s32.totalorder %s27, 0
      %p54 = por %p52, %p53
      %s56 = sadd.s32 %s55, 1
      %p59 = scmp.eq.s32.totalorder %s21, 1
      %p60 = scmp.ne.s32.totalorder %s55, %s57
      %p61 = scmp.eq.s32.totalorder %s21, 0
      %p62 = por %p60, %p61
      %p63 = scmp.ne.s32.totalorder %s55, %s57
      %p64 = scmp.eq.s32.totalorder %s26, 1
      %p65 = por %p63, %p64
      %p66 = scmp.ne.s32.totalorder %s57, %s58
      %p67 = scmp.eq.s32.totalorder %s26, 0
      %p68 = por %p66, %p67
      %p69 = scmp.ne.s32.totalorder %s57, %s58
      %p70 = scmp.eq.s32.totalorder %s27, 1
      %p71 = por %p69, %p70
      %p73 = scmp.ne.s32.totalorder %s58, %s72
      %p74 = scmp.eq.s32.totalorder %s27, 0
      %p75 = por %p73, %p74
      %s77 = sadd.s32 %s76, 1
      %p80 = scmp.eq.s32.totalorder %s21, 1
      %p81 = scmp.ne.s32.totalorder %s76, %s78
      %p82 = scmp.eq.s32.totalorder %s21, 0
      %p83 = por %p81, %p82
      %p84 = scmp.ne.s32.totalorder %s76, %s78
      %p85 = scmp.eq.s32.totalorder %s26, 1
      %p86 = por %p84, %p85
      %p87 = scmp.ne.s32.totalorder %s78, %s79
      %p88 = scmp.eq.s32.totalorder %s26, 0
      %p89 = por %p87, %p88
      %p90 = scmp.ne.s32.totalorder %s78, %s79
      %p91 = scmp.eq.s32.totalorder %s27, 1
      %p92 = por %p90, %p91
      %p94 = scmp.ne.s32.totalorder %s79, %s93
      %p95 = scmp.eq.s32.totalorder %s27, 0
      %p96 = por %p94, %p95
      %s97 = ssub.s32 %s21, %s28
      %p98 = scmp.eq.s32.totalorder %s97, 0
      %s100 = sadd.s32 %s99, 1
      %s101 = scalar_select %p98, %s99, %s100
      %p104 = pneg %p98
      %p105 = scmp.eq.s32.totalorder %s21, 1
      %p106 = por %p104, %p105
      %p107 = scmp.ne.s32.totalorder %s99, %s102
      %p108 = scmp.eq.s32.totalorder %s21, 0
      %p109 = por %p107, %p108
      %p110 = scmp.ne.s32.totalorder %s99, %s102
      %p111 = scmp.eq.s32.totalorder %s26, 1
      %p112 = por %p110, %p111
      %p113 = scmp.ne.s32.totalorder %s102, %s103
      %p114 = scmp.eq.s32.totalorder %s26, 0
      %p115 = por %p113, %p114
      %p116 = scmp.ne.s32.totalorder %s102, %s103
      %p117 = scmp.eq.s32.totalorder %s27, 1
      %p118 = por %p116, %p117
      %p120 = scmp.ne.s32.totalorder %s103, %s119
      %p121 = scmp.eq.s32.totalorder %s27, 0
      %p122 = por %p120, %p121
      %s123 = ssub.s32 %s21, %s28
      %p124 = scmp.eq.s32.totalorder %s123, 0
      %s126 = sadd.s32 %s125, 1
      %s127 = scalar_select %p124, %s125, %s126
      %p130 = pneg %p124
      %p131 = scmp.eq.s32.totalorder %s21, 1
      %p132 = por %p130, %p131
      %p133 = scmp.ne.s32.totalorder %s125, %s128
      %p134 = scmp.eq.s32.totalorder %s21, 0
      %p135 = por %p133, %p134
      %p136 = scmp.ne.s32.totalorder %s125, %s128
      %p137 = scmp.eq.s32.totalorder %s26, 1
      %p138 = por %p136, %p137
      %p139 = scmp.ne.s32.totalorder %s128, %s129
      %p140 = scmp.eq.s32.totalorder %s26, 0
      %p141 = por %p139, %p140
      %p142 = scmp.ne.s32.totalorder %s128, %s129
      %p143 = scmp.eq.s32.totalorder %s27, 1
      %p144 = por %p142, %p143
      %p146 = scmp.ne.s32.totalorder %s129, %s145
      %p147 = scmp.eq.s32.totalorder %s27, 0
      %p148 = por %p146, %p147
      %p149 = scmp.le.s32.totalorder 1, %s21
      %p150 = scmp.lt.s32.totalorder %s21, 3
      %p151 = pnand %p149, %p150
      %p152 = pneg %p151
      // Predicated region
      $region9: #{tpu_custom_call.1} parent=5 // pred_check
        _
      $region10: #{tpu_custom_call.1} parent=5 // pred_check_branch
        %154 = sbr.rel (%p151) target = $region12
      $region11: #{tpu_custom_call.1} parent=5 // pred_region
        %s155 = ssub.s32 %s21, 1
        // Predicated region
        $region13: #{tpu_custom_call.1} parent=11 // pred_check
          %p156 = pneg %p68
        $region14: #{tpu_custom_call.1} parent=11 // pred_check_branch
          %158 = sbr.rel (%p156) target = $region16
        $region15: #{tpu_custom_call.1} parent=11 // pred_region
          %s160 = ssub.s32 512, 512
          %161 = vsyncadd [#allocation6], %s160
          %s162 = sshll.u32 [#allocation5], 4
          %s163 = int_to_ptr.vmem [resolvable:$true] %s162
          %168 = dma.hbm_to_vmem [thread:$0]  %s1, 512, %s163, [#allocation6], 128, 128, 8
        $region16: #{tpu_custom_call.1} parent=11 // pred_fallthru
          _
        // Predicated region
        $region17: #{tpu_custom_call.1} parent=11 // pred_check
          %p169 = pneg %p89
        $region18: #{tpu_custom_call.1} parent=11 // pred_check_branch
          %171 = sbr.rel (%p169) target = $region20
        $region19: #{tpu_custom_call.1} parent=11 // pred_region
          %s173 = ssub.s32 2048, 2048
          %174 = vsyncadd [#allocation6], %s173
          %s175 = sshll.u32 [#allocation7], 4
          %s176 = int_to_ptr.vmem [resolvable:$true] %s175
          %181 = dma.hbm_to_vmem [thread:$0]  %s2, 2048, %s176, [#allocation6], 128, 128, 8
        $region20: #{tpu_custom_call.1} parent=11 // pred_fallthru
          _
      $region12: #{tpu_custom_call.1} parent=5 // pred_fallthru
        _
      %p182 = scmp.lt.s32.totalorder %s21, 2
      // Predicated region
      $region21: #{tpu_custom_call.1} parent=5 // pred_check
        %p183 = pneg %p182
      $region22: #{tpu_custom_call.1} parent=5 // pred_check_branch
        %185 = sbr.rel (%p183) target = $region24
      $region23: #{tpu_custom_call.1} parent=5 // pred_region
        // Predicated region
        $region25: #{tpu_custom_call.1} parent=23 // pred_check
          %p186 = pneg %p41
        $region26: #{tpu_custom_call.1} parent=23 // pred_check_branch
          %188 = sbr.rel (%p186) target = $region28
        $region27: #{tpu_custom_call.1} parent=23 // pred_region
          %s189 = sand.u32 %s31, 1
          %s190 = scalar_lea.sflag [#allocation3], %s189
          %s191 = sand.u32 %s31, 1
          %s192 = smul.addr %s191, 8
          %s193 = scalar_lea.vmem [#allocation2], %s192
          %s195 = ssub.s32 128, 128
          %196 = vsyncadd %s190, %s195
          %s197 = smul.addr %s21, 128
          %s198 = scalar_lea.hbm %s0, %s197
          %s200 = sshll.u32 %s193, 4
          %s201 = int_to_ptr.vmem [resolvable:$true] %s200
          %203 = dma.hbm_to_vmem [thread:$0]  %s198, 128, %s201, %s190
        $region28: #{tpu_custom_call.1} parent=23 // pred_fallthru
          _
      $region24: #{tpu_custom_call.1} parent=5 // pred_fallthru
        _
      %p204 = scmp.le.s32.totalorder 1, %s21
      %p205 = scmp.lt.s32.totalorder %s21, 3
      %p206 = pnand %p204, %p205
      %p207 = pneg %p206
      // Predicated region
      $region29: #{tpu_custom_call.1} parent=5 // pred_check
        _
      $region30: #{tpu_custom_call.1} parent=5 // pred_check_branch
        %209 = sbr.rel (%p206) target = $region32
      $region31: #{tpu_custom_call.1} parent=5 // pred_region
        %s210 = ssub.s32 %s21, 1
        %s211 = sand.u32 %s34, 1
        %s212 = scalar_lea.sflag [#allocation3], %s211
        %s213 = sand.u32 %s34, 1
        %s214 = smul.addr %s213, 8
        %s215 = scalar_lea.vmem [#allocation2], %s214
        // Predicated region
        $region33: #{tpu_custom_call.1} parent=31 // pred_check
          %p216 = pneg %p47
        $region34: #{tpu_custom_call.1} parent=31 // pred_check_branch
          %218 = sbr.rel (%p216) target = $region36
        $region35: #{tpu_custom_call.1} parent=31 // pred_region
          %219 = dma.done %s212, 128
        $region36: #{tpu_custom_call.1} parent=31 // pred_fallthru
          _
        // Predicated region
        $region37: #{tpu_custom_call.1} parent=31 // pred_check
          %p220 = pneg %p68
        $region38: #{tpu_custom_call.1} parent=31 // pred_check_branch
          %222 = sbr.rel (%p220) target = $region40
        $region39: #{tpu_custom_call.1} parent=31 // pred_region
          %223 = dma.done [#allocation6], 512
        $region40: #{tpu_custom_call.1} parent=31 // pred_fallthru
          _
        // Predicated region
        $region41: #{tpu_custom_call.1} parent=31 // pred_check
          %p224 = pneg %p89
        $region42: #{tpu_custom_call.1} parent=31 // pred_check_branch
          %226 = sbr.rel (%p224) target = $region44
        $region43: #{tpu_custom_call.1} parent=31 // pred_region
          %227 = dma.done [#allocation6], 2048
        $region44: #{tpu_custom_call.1} parent=31 // pred_fallthru
          _
        %s228 = sand.u32 %s34, 1
        %s229 = scalar_lea.sflag [#allocation3], %s228
        %s230 = sand.u32 %s34, 1
        %s231 = smul.addr %s230, 8
        %s232 = scalar_lea.vmem [#allocation2], %s231
        %p233 = pneg %p47
        %p234 = pneg %p44
        %p235 = pneg %p68
        %p236 = pneg %p65
        %p237 = pneg %p89
        %p238 = pneg %p86
        %p239 = pneg %p115
        %p240 = pneg %p112
        %s241 = sand.u32 %s102, 1
        %s242 = scalar_lea.sflag [#allocation4], %s241
        %s243 = sand.u32 %s102, 1
        %s244 = smul.addr %s243, 8
        %s245 = scalar_lea.vmem [#allocation8], %s244
        %p246 = pneg %p141
        %p247 = pneg %p138
        %s248 = sand.u32 %s128, 1
        %s249 = scalar_lea.sflag [#allocation10], %s248
        %s250 = sand.u32 %s128, 1
        %s251 = smul.addr %s250, 8
        %s252 = scalar_lea.vmem [#allocation9], %s251
        %v253 = vld [vmem:[%s215] sm:$0xff]
        %v254 = vmul.f32 %v253, %v253
        %vm255 = vcmask 261120
        %v256 = vsel %vm255, %v254, 0.0
        %257 = vadd.xlane.f32.xlu0 %v256
        %v258 = vpop.xlane.xlu0 %257
        %v259 = vmax.f32 %v258, 1e-24
        %v260 = vrsqrt.pop %v259
        %v261 = vmul.f32 %v253, %v260
        %v262 = vand.u32 2147483647, %v261
        %v263 = vsub.f32 %v261, 2.0
        %v264 = vand.u32 2147483647, %v263
        %v265 = vsub.f32 %v262, %v264
        %v266 = vadd.f32 %v265, 2.0
        %v267 = vmul.f32 %v266, 0.5
        %v268 = vmul.f32 %v267, 127.5
        %v269 = vround.ne.pseudo %v268
        %v270 = vmul.f32 %v269, 0.007843138
        %v271 = vld [vmem:[#allocation5] sm:$0xff]
        %v272 = vld [vmem:[#allocation5 + $0x8] sm:$0xff]
        %v273 = vld [vmem:[#allocation5 + $0x10] sm:$0xff]
        %v274 = vld [vmem:[#allocation5 + $0x18] sm:$0xff]
        %v276 = vsel %vm255, %v270, 0
        %278 = vmatprep.subr.mxu0 0.0
        %279 = vmatpush1.msra.mxu0 %v271
        %280 = vmatprep.subr.mxu0 0.0
        %281 = vmatpush1.msra.mxu0 %v272
        %282 = vmatprep.subr.mxu0 0.0
        %283 = vmatpush1.msra.mxu0 %v273
        %284 = vmatprep.subr.mxu0 0.0
        %285 = vmatpush1.msra.mxu0 %v274
        %286 = vmatprep.subr.mxu0 0.0
        %287 = vmatpush1.msra.mxu0 0.0
        %288 = vmatprep.subr.mxu0 0.0
        %289 = vmatpush1.msra.mxu0 0.0
        %290 = vmatprep.subr.mxu0 0.0
        %291 = vmatpush1.msra.mxu0 0.0
        %292 = vmatprep.subr.mxu0 0.0
        %293 = vmatpush1.msra.mxu0 0.0
        %294 = vmatprep.subr.mxu0 0.0
        %295 = vmatpush1.msra.mxu0 0.0
        %296 = vmatprep.subr.mxu0 0.0
        %297 = vmatpush1.msra.mxu0 0.0
        %298 = vmatprep.subr.mxu0 0.0
        %299 = vmatpush1.msra.mxu0 0.0
        %300 = vmatprep.subr.mxu0 0.0
        %301 = vmatpush1.msra.mxu0 0.0
        %302 = vmatprep.subr.mxu0 0.0
        %303 = vmatpush1.msra.mxu0 0.0
        %304 = vmatprep.subr.mxu0 0.0
        %305 = vmatpush1.msra.mxu0 0.0
        %306 = vmatprep.subr.mxu0 0.0
        %307 = vmatpush1.msra.mxu0 0.0
        %308 = vmatprep.subr.mxu0 0.0
        %309 = vmatpush1.msra.mxu0 0.0
        %310 = vmatprep.subr.mxu0 0.0
        %311 = vmatpush1.msra.mxu0 0.0
        %312 = vmatprep.subr.mxu0 0.0
        %313 = vmatpush1.msra.mxu0 0.0
        %314 = vmatprep.subr.mxu0 0.0
        %315 = vmatpush1.msra.mxu0 0.0
        %316 = vmatprep.subr.mxu0 0.0
        %317 = vmatpush1.msra.mxu0 0.0
        %318 = vmatprep.subr.mxu0 0.0
        %319 = vmatpush1.msra.mxu0 0.0
        %320 = vmatprep.subr.mxu0 0.0
        %321 = vmatpush1.msra.mxu0 0.0
        %322 = vmatprep.subr.mxu0 0.0
        %323 = vmatpush1.msra.mxu0 0.0
        %324 = vmatprep.subr.mxu0 0.0
        %325 = vmatpush1.msra.mxu0 0.0
        %326 = vmatprep.subr.mxu0 0.0
        %327 = vmatpush1.msra.mxu0 0.0
        %328 = vmatprep.subr.mxu0 0.0
        %329 = vmatpush1.msra.mxu0 0.0
        %330 = vmatprep.subr.mxu0 0.0
        %331 = vmatpush1.msra.mxu0 0.0
        %332 = vmatprep.subr.mxu0 0.0
        %333 = vmatpush1.msra.mxu0 0.0
        %334 = vmatprep.subr.mxu0 0.0
        %335 = vmatpush1.msra.mxu0 0.0
        %336 = vmatprep.subr.mxu0 0.0
        %337 = vmatpush1.msra.mxu0 0.0
        %338 = vmatprep.subr.mxu0 0.0
        %339 = vmatpush1.msra.mxu0 0.0
        %340 = vmatprep.subr.mxu0 0.0
        %341 = vmatpush1.msra.mxu0 0.0
        %342 = vmatprep.mubr.f32.mxu0 0.0
        %343 = vmatmul.mubr.f32.gmra.mrb[0].mxu0 %v276
        %v344 = vpop.f32.mrb[0].mxu0
        %v345 = vadd.f32 0.0, %v344
        %v346 = vpop.f32.mrb[0].mxu0
        %347 = vdwg.mxu0
        %v348 = vmul.f32 %v270, %v270
        %v349 = vsel %vm255, %v348, 0.0
        %350 = vadd.xlane.f32.xlu0 %v349
        %v351 = vpop.xlane.xlu0 %350
        %v352 = vadd.f32 %v351, 1.0
        %v353 = vmul.f32 %v345, 2.0
        %v354 = vsub.f32 %v352, %v353
        %v355 = vmax.f32 %v354, 0.0
        %v356 = vsub.f32 0.0, %v355
        %357 = vst [vmem:[%s245] sm:$0xff] %v356
        %358 = vmax.xlane.f32.xlu0 %v356
        %v359 = vpop.xlane.xlu0 %358
        %v360 = vsub.f32 %v356, %v359
        %v361 = vmul.f32 %v360, 1.442695
        %v362 = vpow.pop %v361
        %v363 = vld [vmem:[#allocation7] sm:$0xff]
        %v364 = vld [vmem:[#allocation7 + $0x8] sm:$0xff]
        %v365 = vld [vmem:[#allocation7 + $0x10] sm:$0xff]
        %v366 = vld [vmem:[#allocation7 + $0x18] sm:$0xff]
        %v367 = vld [vmem:[#allocation7 + $0x20] sm:$0xff]
        %v368 = vld [vmem:[#allocation7 + $0x28] sm:$0xff]
        %v369 = vld [vmem:[#allocation7 + $0x30] sm:$0xff]
        %v370 = vld [vmem:[#allocation7 + $0x38] sm:$0xff]
        %v371 = vld [vmem:[#allocation7 + $0x40] sm:$0xff]
        %v372 = vld [vmem:[#allocation7 + $0x48] sm:$0xff]
        %v373 = vld [vmem:[#allocation7 + $0x50] sm:$0xff]
        %v374 = vld [vmem:[#allocation7 + $0x58] sm:$0xff]
        %v375 = vld [vmem:[#allocation7 + $0x60] sm:$0xff]
        %v376 = vld [vmem:[#allocation7 + $0x68] sm:$0xff]
        %v377 = vld [vmem:[#allocation7 + $0x70] sm:$0xff]
        %v378 = vld [vmem:[#allocation7 + $0x78] sm:$0xff]
        %v379 = vmul.f32 %v356, %v362
        %380 = vmatprep.subr.mxu0 0.0
        %381 = vmatpush1.msra.mxu0 %v363
        %382 = vmatprep.subr.mxu0 0.0
        %383 = vmatpush1.msra.mxu0 %v364
        %384 = vmatprep.subr.mxu0 0.0
        %385 = vmatpush1.msra.mxu0 %v365
        %386 = vmatprep.subr.mxu0 0.0
        %387 = vmatpush1.msra.mxu0 %v366
        %388 = vmatprep.subr.mxu0 0.0
        %389 = vmatpush1.msra.mxu0 %v367
        %390 = vmatprep.subr.mxu0 0.0
        %391 = vmatpush1.msra.mxu0 %v368
        %392 = vmatprep.subr.mxu0 0.0
        %393 = vmatpush1.msra.mxu0 %v369
        %394 = vmatprep.subr.mxu0 0.0
        %395 = vmatpush1.msra.mxu0 %v370
        %396 = vmatprep.subr.mxu0 0.0
        %397 = vmatpush1.msra.mxu0 %v371
        %398 = vmatprep.subr.mxu0 0.0
        %399 = vmatpush1.msra.mxu0 %v372
        %400 = vmatprep.subr.mxu0 0.0
        %401 = vmatpush1.msra.mxu0 %v373
        %402 = vmatprep.subr.mxu0 0.0
        %403 = vmatpush1.msra.mxu0 %v374
        %404 = vmatprep.subr.mxu0 0.0
        %405 = vmatpush1.msra.mxu0 %v375
        %406 = vmatprep.subr.mxu0 0.0
        %407 = vmatpush1.msra.mxu0 %v376
        %408 = vmatprep.subr.mxu0 0.0
        %409 = vmatpush1.msra.mxu0 %v377
        %410 = vmatprep.subr.mxu0 0.0
        %411 = vmatpush1.msra.mxu0 %v378
        %412 = vmatprep.subr.mxu0 0.0
        %413 = vmatpush1.msra.mxu0 0.0
        %414 = vmatprep.subr.mxu0 0.0
        %415 = vmatpush1.msra.mxu0 0.0
        %416 = vmatprep.subr.mxu0 0.0
        %417 = vmatpush1.msra.mxu0 0.0
        %418 = vmatprep.subr.mxu0 0.0
        %419 = vmatpush1.msra.mxu0 0.0
        %420 = vmatprep.subr.mxu0 0.0
        %421 = vmatpush1.msra.mxu0 0.0
        %422 = vmatprep.subr.mxu0 0.0
        %423 = vmatpush1.msra.mxu0 0.0
        %424 = vmatprep.subr.mxu0 0.0
        %425 = vmatpush1.msra.mxu0 0.0
        %426 = vmatprep.subr.mxu0 0.0
        %427 = vmatpush1.msra.mxu0 0.0
        %428 = vmatprep.subr.mxu0 0.0
        %429 = vmatpush1.msra.mxu0 0.0
        %430 = vmatprep.subr.mxu0 0.0
        %431 = vmatpush1.msra.mxu0 0.0
        %432 = vmatprep.subr.mxu0 0.0
        %433 = vmatpush1.msra.mxu0 0.0
        %434 = vmatprep.subr.mxu0 0.0
        %435 = vmatpush1.msra.mxu0 0.0
        %436 = vmatprep.subr.mxu0 0.0
        %437 = vmatpush1.msra.mxu0 0.0
        %438 = vmatprep.subr.mxu0 0.0
        %439 = vmatpush1.msra.mxu0 0.0
        %440 = vmatprep.subr.mxu0 0.0
        %441 = vmatpush1.msra.mxu0 0.0
        %442 = vmatprep.subr.mxu0 0.0
        %443 = vmatpush1.msra.mxu0 0.0
        %444 = vmatprep.mubr.f32.mxu0 0.0
        %445 = vmatmul.mubr.f32.gmra.mrb[0].mxu0 %v379
        %v446 = vpop.f32.mrb[0].mxu0
        %v447 = vadd.f32 0.0, %v446
        %v448 = vpop.f32.mrb[0].mxu0
        %449 = vdwg.mxu0
        %450 = vmatprep.subr.mxu0 0.0
        %451 = vmatpush1.msra.mxu0 %v363
        %452 = vmatprep.subr.mxu0 0.0
        %453 = vmatpush1.msra.mxu0 %v364
        %454 = vmatprep.subr.mxu0 0.0
        %455 = vmatpush1.msra.mxu0 %v365
        %456 = vmatprep.subr.mxu0 0.0
        %457 = vmatpush1.msra.mxu0 %v366
        %458 = vmatprep.subr.mxu0 0.0
        %459 = vmatpush1.msra.mxu0 %v367
        %460 = vmatprep.subr.mxu0 0.0
        %461 = vmatpush1.msra.mxu0 %v368
        %462 = vmatprep.subr.mxu0 0.0
        %463 = vmatpush1.msra.mxu0 %v369
        %464 = vmatprep.subr.mxu0 0.0
        %465 = vmatpush1.msra.mxu0 %v370
        %466 = vmatprep.subr.mxu0 0.0
        %467 = vmatpush1.msra.mxu0 %v371
        %468 = vmatprep.subr.mxu0 0.0
        %469 = vmatpush1.msra.mxu0 %v372
        %470 = vmatprep.subr.mxu0 0.0
        %471 = vmatpush1.msra.mxu0 %v373
        %472 = vmatprep.subr.mxu0 0.0
        %473 = vmatpush1.msra.mxu0 %v374
        %474 = vmatprep.subr.mxu0 0.0
        %475 = vmatpush1.msra.mxu0 %v375
        %476 = vmatprep.subr.mxu0 0.0
        %477 = vmatpush1.msra.mxu0 %v376
        %478 = vmatprep.subr.mxu0 0.0
        %479 = vmatpush1.msra.mxu0 %v377
        %480 = vmatprep.subr.mxu0 0.0
        %481 = vmatpush1.msra.mxu0 %v378
        %482 = vmatprep.subr.mxu0 0.0
        %483 = vmatpush1.msra.mxu0 0.0
        %484 = vmatprep.subr.mxu0 0.0
        %485 = vmatpush1.msra.mxu0 0.0
        %486 = vmatprep.subr.mxu0 0.0
        %487 = vmatpush1.msra.mxu0 0.0
        %488 = vmatprep.subr.mxu0 0.0
        %489 = vmatpush1.msra.mxu0 0.0
        %490 = vmatprep.subr.mxu0 0.0
        %491 = vmatpush1.msra.mxu0 0.0
        %492 = vmatprep.subr.mxu0 0.0
        %493 = vmatpush1.msra.mxu0 0.0
        %494 = vmatprep.subr.mxu0 0.0
        %495 = vmatpush1.msra.mxu0 0.0
        %496 = vmatprep.subr.mxu0 0.0
        %497 = vmatpush1.msra.mxu0 0.0
        %498 = vmatprep.subr.mxu0 0.0
        %499 = vmatpush1.msra.mxu0 0.0
        %500 = vmatprep.subr.mxu0 0.0
        %501 = vmatpush1.msra.mxu0 0.0
        %502 = vmatprep.subr.mxu0 0.0
        %503 = vmatpush1.msra.mxu0 0.0
        %504 = vmatprep.subr.mxu0 0.0
        %505 = vmatpush1.msra.mxu0 0.0
        %506 = vmatprep.subr.mxu0 0.0
        %507 = vmatpush1.msra.mxu0 0.0
        %508 = vmatprep.subr.mxu0 0.0
        %509 = vmatpush1.msra.mxu0 0.0
        %510 = vmatprep.subr.mxu0 0.0
        %511 = vmatpush1.msra.mxu0 0.0
        %512 = vmatprep.subr.mxu0 0.0
        %513 = vmatpush1.msra.mxu0 0.0
        %514 = vmatprep.mubr.f32.mxu0 0.0
        %515 = vmatmul.mubr.f32.gmra.mrb[0].mxu0 %v362
        %v516 = vpop.f32.mrb[0].mxu0
        %v517 = vadd.f32 1e-30, %v516
        %v518 = vpop.f32.mrb[0].mxu0
        %519 = vdwg.mxu0
        %v520 = vrcp.pop %v517
        %v521 = vmul.f32 %v447, %v520
        %522 = vst [vmem:[%s252] sm:$0xff] %v521
        %s523 = sand.u32 %s102, 1
        %s524 = scalar_lea.sflag [#allocation4], %s523
        %s525 = sand.u32 %s102, 1
        %s526 = smul.addr %s525, 8
        %s527 = scalar_lea.vmem [#allocation8], %s526
        %s528 = sand.u32 %s128, 1
        %s529 = scalar_lea.sflag [#allocation10], %s528
        %s530 = sand.u32 %s128, 1
        %s531 = smul.addr %s530, 8
        %s532 = scalar_lea.vmem [#allocation9], %s531
        // Predicated region
        $region45: #{tpu_custom_call.1} parent=31 // pred_check
          %p533 = pneg %p112
        $region46: #{tpu_custom_call.1} parent=31 // pred_check_branch
          %535 = sbr.rel (%p533) target = $region48
        $region47: #{tpu_custom_call.1} parent=31 // pred_region
          %s537 = ssub.s32 128, 128
          %538 = vsyncadd %s524, %s537
          %s539 = smul.addr %s26, 128
          %s540 = scalar_lea.hbm %s3, %s539
          %s542 = sshll.u32 %s527, 4
          %s543 = int_to_ptr.vmem [resolvable:$true] %s542
          %545 = dma.vmem_to_hbm [thread:$0]  %s543, 128, %s540, %s524
        $region48: #{tpu_custom_call.1} parent=31 // pred_fallthru
          _
        // Predicated region
        $region49: #{tpu_custom_call.1} parent=31 // pred_check
          %p546 = pneg %p138
        $region50: #{tpu_custom_call.1} parent=31 // pred_check_branch
          %548 = sbr.rel (%p546) target = $region52
        $region51: #{tpu_custom_call.1} parent=31 // pred_region
          %s550 = ssub.s32 128, 128
          %551 = vsyncadd %s529, %s550
          %s552 = smul.addr %s26, 128
          %s553 = scalar_lea.hbm %s4, %s552
          %s555 = sshll.u32 %s532, 4
          %s556 = int_to_ptr.vmem [resolvable:$true] %s555
          %558 = dma.vmem_to_hbm [thread:$0]  %s556, 128, %s553, %s529
        $region52: #{tpu_custom_call.1} parent=31 // pred_fallthru
          _
      $region32: #{tpu_custom_call.1} parent=5 // pred_fallthru
        _
      %p559 = scmp.le.s32.totalorder 2, %s21
      // Predicated region
      $region53: #{tpu_custom_call.1} parent=5 // pred_check
        %p560 = pneg %p559
      $region54: #{tpu_custom_call.1} parent=5 // pred_check_branch
        %562 = sbr.rel (%p560) target = $region56
      $region55: #{tpu_custom_call.1} parent=5 // pred_region
        %s563 = ssub.s32 %s21, 2
        // Predicated region
        $region57: #{tpu_custom_call.1} parent=55 // pred_check
          %p564 = pneg %p118
        $region58: #{tpu_custom_call.1} parent=55 // pred_check_branch
          %566 = sbr.rel (%p564) target = $region60
        $region59: #{tpu_custom_call.1} parent=55 // pred_region
          %s567 = sand.u32 %s103, 1
          %s568 = scalar_lea.sflag [#allocation4], %s567
          %s569 = sand.u32 %s103, 1
          %s570 = smul.addr %s569, 8
          %s571 = scalar_lea.vmem [#allocation8], %s570
          %572 = dma.done %s568, 128
        $region60: #{tpu_custom_call.1} parent=55 // pred_fallthru
          _
        // Predicated region
        $region61: #{tpu_custom_call.1} parent=55 // pred_check
          %p573 = pneg %p144
        $region62: #{tpu_custom_call.1} parent=55 // pred_check_branch
          %575 = sbr.rel (%p573) target = $region64
        $region63: #{tpu_custom_call.1} parent=55 // pred_region
          %s576 = sand.u32 %s129, 1
          %s577 = scalar_lea.sflag [#allocation10], %s576
          %s578 = sand.u32 %s129, 1
          %s579 = smul.addr %s578, 8
          %s580 = scalar_lea.vmem [#allocation9], %s579
          %581 = dma.done %s577, 128
        $region64: #{tpu_custom_call.1} parent=55 // pred_fallthru
          _
      $region56: #{tpu_custom_call.1} parent=5 // pred_fallthru
        _
    $region6: #{tpu_custom_call.1} parent=1 // loop_footer
      %s25 = sadd.s32 1, %s21
    $region7: #{tpu_custom_call.1} parent=1 // loop_footer_branch
      %20 = sbr.rel target = $region3
    $region8: #{tpu_custom_call.1} parent=1 // loop_exit
      _
    %582 = vsyncpa [#allocation3], 1
    %s583 = scalar_lea.sflag [#allocation3], 1
    %584 = vsyncpa %s583, 1
    %585 = vsyncpa [#allocation6], 1
    %586 = vsyncpa [#allocation4], 1
    %s587 = scalar_lea.sflag [#allocation4], 1
    %588 = vsyncpa %s587, 1
    %589 = vsyncpa [#allocation10], 1
    %s590 = scalar_lea.sflag [#allocation10], 1
    %591 = vsyncpa %s590, 1

// kernel: tpu_custom_call.1
$region0: #{tpu_custom_call.1}
  #allocation0 [shape = 'u32[]', space=smem, size = 0x4, offset = 0x4, fixed_abs, tag = 'smem constant byte address 0x4 - core index']
  #allocation1 [shape = 'u32[144,128]{1,0:T(1,128)}', space=vmem, size = 0x12000, scoped, tag = 'internal scratch']
  %s0 = inlined_call_operand.hbm [shape: f32[16,32], index: 0, kind: input, shape index: {}]
  %s1 = inlined_call_operand.hbm [shape: f32[32,128], index: 1, kind: input, shape index: {}]
  %s2 = inlined_call_operand.hbm [shape: f32[128,128], index: 2, kind: input, shape index: {}]
  %s3 = inlined_call_operand.hbm [shape: f32[16,128], index: 3, kind: output, shape index: {0}]
  %s4 = inlined_call_operand.hbm [shape: f32[16,128], index: 4, kind: output, shape index: {1}]
  %5 = xla_tuple %s3, %s4
  %s6 = sld [smem:[#allocation0]]
  $region65: #{tpu_custom_call.1} parent=0
    _
  %s8 = ssub.s32 1, %s6
  %s9 = scalar_select 0, %s8, %s6
  $region1: #{tpu_custom_call.1} parent=0
    #allocation2 [shape = 'u8[8192]{0}', space=vmem, size = 0x2000, scoped, tag = 'input window, operand 0']
    #allocation3 [shape = 's32[2]{0}', space=sflag, size = 0x8, scoped, tag = 'scoped memory for tpu_custom_call.1']
    #allocation4 [shape = 's32[2]{0}', space=sflag, size = 0x8, scoped, tag = 'scoped memory for tpu_custom_call.1']
    #allocation5 [shape = 'u8[16384]{0}', space=vmem, size = 0x4000, scoped, tag = 'input window, operand 1, single buffered']
    #allocation6 [shape = 's32[1]{0}', space=sflag, size = 0x4, scoped, tag = 'scoped memory for tpu_custom_call.1']
    #allocation7 [shape = 'u8[65536]{0}', space=vmem, size = 0x10000, scoped, tag = 'input window, operand 2, single buffered']
    #allocation8 [shape = 'u8[8192]{0}', space=vmem, size = 0x2000, scoped, tag = 'output window, operand 0']
    #allocation9 [shape = 'u8[8192]{0}', space=vmem, size = 0x2000, scoped, tag = 'output window, operand 1']
    #allocation10 [shape = 's32[2]{0}', space=sflag, size = 0x8, scoped, tag = 'scoped memory for tpu_custom_call.1']
    %10 = vsyncpa [#allocation3], 0
    %s11 = scalar_lea.sflag [#allocation3], 1
    %12 = vsyncpa %s11, 0
    %13 = vsyncpa [#allocation6], 0
    %14 = vsyncpa [#allocation4], 0
    %s15 = scalar_lea.sflag [#allocation4], 1
    %16 = vsyncpa %s15, 0
    %17 = vsyncpa [#allocation10], 0
    %s18 = scalar_lea.sflag [#allocation10], 1
    %19 = vsyncpa %s18, 0
    loop: start=0, step=1, limit=4
    $region2: #{tpu_custom_call.1} parent=1 // loop_pre_header
      _
    $region3: #{tpu_custom_call.1} parent=1 // loop_header
      %s21 = sphi 0, %s25
      %p22 = scmp.ge.s32.totalorder %s21, 4
      %s31 = sphi 0, %s33
      %s34 = sphi 0, %s31
      %s35 = sphi 0, %s34
      %s51 = sphi 0, %s35
      %s55 = sphi 0, %s55
      %s57 = sphi 0, %s55
      %s58 = sphi 0, %s57
      %s72 = sphi 0, %s58
      %s76 = sphi 0, %s76
      %s78 = sphi 0, %s76
      %s79 = sphi 0, %s78
      %s93 = sphi 0, %s79
      %s99 = sphi 0, %s101
      %s102 = sphi 0, %s99
      %s103 = sphi 0, %s102
      %s119 = sphi 0, %s103
      %s125 = sphi 0, %s127
      %s128 = sphi 0, %s125
      %s129 = sphi 0, %s128
      %s145 = sphi 0, %s129
    $region4: #{tpu_custom_call.1} parent=1 // loop_header_branch
      %24 = sbr.rel (%p22) target = $region8
    $region5: #{tpu_custom_call.1} parent=1 // loop_body
      %s26 = ssub.s32 %s21, 1
      %s27 = ssub.s32 %s21, 2
      %s28 = sadd.s32 %s21, 1
      %s29 = ssub.s32 %s21, %s28
      %p30 = scmp.eq.s32.totalorder %s29, 0
      %s32 = sadd.s32 %s31, 1
      %s33 = scalar_select %p30, %s31, %s32
      %p36 = pneg %p30
      %p37 = scmp.eq.s32.totalorder %s21, 1
      %p38 = por %p36, %p37
      %p39 = scmp.ne.s32.totalorder %s31, %s34
      %p40 = scmp.eq.s32.totalorder %s21, 0
      %p41 = por %p39, %p40
      %p42 = scmp.ne.s32.totalorder %s31, %s34
      %p43 = scmp.eq.s32.totalorder %s26, 1
      %p44 = por %p42, %p43
      %p45 = scmp.ne.s32.totalorder %s34, %s35
      %p46 = scmp.eq.s32.totalorder %s26, 0
      %p47 = por %p45, %p46
      %p48 = scmp.ne.s32.totalorder %s34, %s35
      %p49 = scmp.eq.s32.totalorder %s27, 1
      %p50 = por %p48, %p49
      %p52 = scmp.ne.s32.totalorder %s35, %s51
      %p53 = scmp.eq.s32.totalorder %s27, 0
      %p54 = por %p52, %p53
      %s56 = sadd.s32 %s55, 1
      %p59 = scmp.eq.s32.totalorder %s21, 1
      %p60 = scmp.ne.s32.totalorder %s55, %s57
      %p61 = scmp.eq.s32.totalorder %s21, 0
      %p62 = por %p60, %p61
      %p63 = scmp.ne.s32.totalorder %s55, %s57
      %p64 = scmp.eq.s32.totalorder %s26, 1
      %p65 = por %p63, %p64
      %p66 = scmp.ne.s32.totalorder %s57, %s58
      %p67 = scmp.eq.s32.totalorder %s26, 0
      %p68 = por %p66, %p67
      %p69 = scmp.ne.s32.totalorder %s57, %s58
      %p70 = scmp.eq.s32.totalorder %s27, 1
      %p71 = por %p69, %p70
      %p73 = scmp.ne.s32.totalorder %s58, %s72
      %p74 = scmp.eq.s32.totalorder %s27, 0
      %p75 = por %p73, %p74
      %s77 = sadd.s32 %s76, 1
      %p80 = scmp.eq.s32.totalorder %s21, 1
      %p81 = scmp.ne.s32.totalorder %s76, %s78
      %p82 = scmp.eq.s32.totalorder %s21, 0
      %p83 = por %p81, %p82
      %p84 = scmp.ne.s32.totalorder %s76, %s78
      %p85 = scmp.eq.s32.totalorder %s26, 1
      %p86 = por %p84, %p85
      %p87 = scmp.ne.s32.totalorder %s78, %s79
      %p88 = scmp.eq.s32.totalorder %s26, 0
      %p89 = por %p87, %p88
      %p90 = scmp.ne.s32.totalorder %s78, %s79
      %p91 = scmp.eq.s32.totalorder %s27, 1
      %p92 = por %p90, %p91
      %p94 = scmp.ne.s32.totalorder %s79, %s93
      %p95 = scmp.eq.s32.totalorder %s27, 0
      %p96 = por %p94, %p95
      %s97 = ssub.s32 %s21, %s28
      %p98 = scmp.eq.s32.totalorder %s97, 0
      %s100 = sadd.s32 %s99, 1
      %s101 = scalar_select %p98, %s99, %s100
      %p104 = pneg %p98
      %p105 = scmp.eq.s32.totalorder %s21, 1
      %p106 = por %p104, %p105
      %p107 = scmp.ne.s32.totalorder %s99, %s102
      %p108 = scmp.eq.s32.totalorder %s21, 0
      %p109 = por %p107, %p108
      %p110 = scmp.ne.s32.totalorder %s99, %s102
      %p111 = scmp.eq.s32.totalorder %s26, 1
      %p112 = por %p110, %p111
      %p113 = scmp.ne.s32.totalorder %s102, %s103
      %p114 = scmp.eq.s32.totalorder %s26, 0
      %p115 = por %p113, %p114
      %p116 = scmp.ne.s32.totalorder %s102, %s103
      %p117 = scmp.eq.s32.totalorder %s27, 1
      %p118 = por %p116, %p117
      %p120 = scmp.ne.s32.totalorder %s103, %s119
      %p121 = scmp.eq.s32.totalorder %s27, 0
      %p122 = por %p120, %p121
      %s123 = ssub.s32 %s21, %s28
      %p124 = scmp.eq.s32.totalorder %s123, 0
      %s126 = sadd.s32 %s125, 1
      %s127 = scalar_select %p124, %s125, %s126
      %p130 = pneg %p124
      %p131 = scmp.eq.s32.totalorder %s21, 1
      %p132 = por %p130, %p131
      %p133 = scmp.ne.s32.totalorder %s125, %s128
      %p134 = scmp.eq.s32.totalorder %s21, 0
      %p135 = por %p133, %p134
      %p136 = scmp.ne.s32.totalorder %s125, %s128
      %p137 = scmp.eq.s32.totalorder %s26, 1
      %p138 = por %p136, %p137
      %p139 = scmp.ne.s32.totalorder %s128, %s129
      %p140 = scmp.eq.s32.totalorder %s26, 0
      %p141 = por %p139, %p140
      %p142 = scmp.ne.s32.totalorder %s128, %s129
      %p143 = scmp.eq.s32.totalorder %s27, 1
      %p144 = por %p142, %p143
      %p146 = scmp.ne.s32.totalorder %s129, %s145
      %p147 = scmp.eq.s32.totalorder %s27, 0
      %p148 = por %p146, %p147
      %p149 = scmp.le.s32.totalorder 1, %s21
      %p150 = scmp.lt.s32.totalorder %s21, 3
      %p151 = pnand %p149, %p150
      %p152 = pneg %p151
      // Predicated region
      $region9: #{tpu_custom_call.1} parent=5 // pred_check
        _
      $region10: #{tpu_custom_call.1} parent=5 // pred_check_branch
        %154 = sbr.rel (%p151) target = $region12
      $region11: #{tpu_custom_call.1} parent=5 // pred_region
        %s155 = ssub.s32 %s21, 1
        // Predicated region
        $region13: #{tpu_custom_call.1} parent=11 // pred_check
          %p156 = pneg %p68
        $region14: #{tpu_custom_call.1} parent=11 // pred_check_branch
          %158 = sbr.rel (%p156) target = $region16
        $region15: #{tpu_custom_call.1} parent=11 // pred_region
          %s160 = ssub.s32 512, 512
          %161 = vsyncadd [#allocation6], %s160
          %s162 = sshll.u32 [#allocation5], 4
          %s163 = int_to_ptr.vmem [resolvable:$true] %s162
          %168 = dma.hbm_to_vmem [thread:$0]  %s1, 512, %s163, [#allocation6], 128, 128, 8
        $region16: #{tpu_custom_call.1} parent=11 // pred_fallthru
          _
        // Predicated region
        $region17: #{tpu_custom_call.1} parent=11 // pred_check
          %p169 = pneg %p89
        $region18: #{tpu_custom_call.1} parent=11 // pred_check_branch
          %171 = sbr.rel (%p169) target = $region20
        $region19: #{tpu_custom_call.1} parent=11 // pred_region
          %s173 = ssub.s32 2048, 2048
          %174 = vsyncadd [#allocation6], %s173
          %s175 = sshll.u32 [#allocation7], 4
          %s176 = int_to_ptr.vmem [resolvable:$true] %s175
          %181 = dma.hbm_to_vmem [thread:$0]  %s2, 2048, %s176, [#allocation6], 128, 128, 8
        $region20: #{tpu_custom_call.1} parent=11 // pred_fallthru
          _
      $region12: #{tpu_custom_call.1} parent=5 // pred_fallthru
        _
      %p182 = scmp.lt.s32.totalorder %s21, 2
      // Predicated region
      $region21: #{tpu_custom_call.1} parent=5 // pred_check
        %p183 = pneg %p182
      $region22: #{tpu_custom_call.1} parent=5 // pred_check_branch
        %185 = sbr.rel (%p183) target = $region24
      $region23: #{tpu_custom_call.1} parent=5 // pred_region
        // Predicated region
        $region25: #{tpu_custom_call.1} parent=23 // pred_check
          %p186 = pneg %p41
        $region26: #{tpu_custom_call.1} parent=23 // pred_check_branch
          %188 = sbr.rel (%p186) target = $region28
        $region27: #{tpu_custom_call.1} parent=23 // pred_region
          %s189 = sand.u32 %s31, 1
          %s190 = scalar_lea.sflag [#allocation3], %s189
          %s191 = sand.u32 %s31, 1
          %s192 = smul.addr %s191, 8
          %s193 = scalar_lea.vmem [#allocation2], %s192
          %s195 = ssub.s32 128, 128
          %196 = vsyncadd %s190, %s195
          %s197 = smul.addr %s21, 128
          %s198 = scalar_lea.hbm %s0, %s197
          %s200 = sshll.u32 %s193, 4
          %s201 = int_to_ptr.vmem [resolvable:$true] %s200
          %203 = dma.hbm_to_vmem [thread:$0]  %s198, 128, %s201, %s190
        $region28: #{tpu_custom_call.1} parent=23 // pred_fallthru
          _
      $region24: #{tpu_custom_call.1} parent=5 // pred_fallthru
        _
      %p204 = scmp.le.s32.totalorder 1, %s21
      %p205 = scmp.lt.s32.totalorder %s21, 3
      %p206 = pnand %p204, %p205
      %p207 = pneg %p206
      // Predicated region
      $region29: #{tpu_custom_call.1} parent=5 // pred_check
        _
      $region30: #{tpu_custom_call.1} parent=5 // pred_check_branch
        %209 = sbr.rel (%p206) target = $region32
      $region31: #{tpu_custom_call.1} parent=5 // pred_region
        %s210 = ssub.s32 %s21, 1
        %s211 = sand.u32 %s34, 1
        %s212 = scalar_lea.sflag [#allocation3], %s211
        %s213 = sand.u32 %s34, 1
        %s214 = smul.addr %s213, 8
        %s215 = scalar_lea.vmem [#allocation2], %s214
        // Predicated region
        $region33: #{tpu_custom_call.1} parent=31 // pred_check
          %p216 = pneg %p47
        $region34: #{tpu_custom_call.1} parent=31 // pred_check_branch
          %218 = sbr.rel (%p216) target = $region36
        $region35: #{tpu_custom_call.1} parent=31 // pred_region
          %219 = dma.done %s212, 128
        $region36: #{tpu_custom_call.1} parent=31 // pred_fallthru
          _
        // Predicated region
        $region37: #{tpu_custom_call.1} parent=31 // pred_check
          %p220 = pneg %p68
        $region38: #{tpu_custom_call.1} parent=31 // pred_check_branch
          %222 = sbr.rel (%p220) target = $region40
        $region39: #{tpu_custom_call.1} parent=31 // pred_region
          %223 = dma.done [#allocation6], 512
        $region40: #{tpu_custom_call.1} parent=31 // pred_fallthru
          _
        // Predicated region
        $region41: #{tpu_custom_call.1} parent=31 // pred_check
          %p224 = pneg %p89
        $region42: #{tpu_custom_call.1} parent=31 // pred_check_branch
          %226 = sbr.rel (%p224) target = $region44
        $region43: #{tpu_custom_call.1} parent=31 // pred_region
          %227 = dma.done [#allocation6], 2048
        $region44: #{tpu_custom_call.1} parent=31 // pred_fallthru
          _
        %s228 = sand.u32 %s34, 1
        %s229 = scalar_lea.sflag [#allocation3], %s228
        %s230 = sand.u32 %s34, 1
        %s231 = smul.addr %s230, 8
        %s232 = scalar_lea.vmem [#allocation2], %s231
        %p233 = pneg %p47
        %p234 = pneg %p44
        %p235 = pneg %p68
        %p236 = pneg %p65
        %p237 = pneg %p89
        %p238 = pneg %p86
        %p239 = pneg %p115
        %p240 = pneg %p112
        %s241 = sand.u32 %s102, 1
        %s242 = scalar_lea.sflag [#allocation4], %s241
        %s243 = sand.u32 %s102, 1
        %s244 = smul.addr %s243, 8
        %s245 = scalar_lea.vmem [#allocation8], %s244
        %p246 = pneg %p141
        %p247 = pneg %p138
        %s248 = sand.u32 %s128, 1
        %s249 = scalar_lea.sflag [#allocation10], %s248
        %s250 = sand.u32 %s128, 1
        %s251 = smul.addr %s250, 8
        %s252 = scalar_lea.vmem [#allocation9], %s251
        %v253 = vld [vmem:[%s215] sm:$0xff]
        %v254 = vmul.f32 %v253, %v253
        %vm255 = vcmask 261120
        %v256 = vsel %vm255, %v254, 0.0
        %257 = vadd.xlane.f32.xlu0 %v256
        %v258 = vpop.xlane.xlu0 %257
        %v259 = vmax.f32 %v258, 1e-24
        %v260 = vrsqrt.pop %v259
        %v261 = vmul.f32 %v253, %v260
        %v262 = vand.u32 2147483647, %v261
        %v263 = vsub.f32 %v261, 2.0
        %v264 = vand.u32 2147483647, %v263
        %v265 = vsub.f32 %v262, %v264
        %v266 = vadd.f32 %v265, 2.0
        %v267 = vmul.f32 %v266, 0.5
        %v268 = vmul.f32 %v267, 127.5
        %v269 = vround.ne.pseudo %v268
        %v270 = vmul.f32 %v269, 0.007843138
        %v271 = vld [vmem:[#allocation5] sm:$0xff]
        %v272 = vld [vmem:[#allocation5 + $0x8] sm:$0xff]
        %v273 = vld [vmem:[#allocation5 + $0x10] sm:$0xff]
        %v274 = vld [vmem:[#allocation5 + $0x18] sm:$0xff]
        %v276 = vsel %vm255, %v270, 0
        %278 = vmatprep.subr.mxu0 0.0
        %279 = vmatpush1.msra.mxu0 %v271
        %280 = vmatprep.subr.mxu0 0.0
        %281 = vmatpush1.msra.mxu0 %v272
        %282 = vmatprep.subr.mxu0 0.0
        %283 = vmatpush1.msra.mxu0 %v273
        %284 = vmatprep.subr.mxu0 0.0
        %285 = vmatpush1.msra.mxu0 %v274
        %286 = vmatprep.subr.mxu0 0.0
        %287 = vmatpush1.msra.mxu0 0.0
        %288 = vmatprep.subr.mxu0 0.0
        %289 = vmatpush1.msra.mxu0 0.0
        %290 = vmatprep.subr.mxu0 0.0
        %291 = vmatpush1.msra.mxu0 0.0
        %292 = vmatprep.subr.mxu0 0.0
        %293 = vmatpush1.msra.mxu0 0.0
        %294 = vmatprep.subr.mxu0 0.0
        %295 = vmatpush1.msra.mxu0 0.0
        %296 = vmatprep.subr.mxu0 0.0
        %297 = vmatpush1.msra.mxu0 0.0
        %298 = vmatprep.subr.mxu0 0.0
        %299 = vmatpush1.msra.mxu0 0.0
        %300 = vmatprep.subr.mxu0 0.0
        %301 = vmatpush1.msra.mxu0 0.0
        %302 = vmatprep.subr.mxu0 0.0
        %303 = vmatpush1.msra.mxu0 0.0
        %304 = vmatprep.subr.mxu0 0.0
        %305 = vmatpush1.msra.mxu0 0.0
        %306 = vmatprep.subr.mxu0 0.0
        %307 = vmatpush1.msra.mxu0 0.0
        %308 = vmatprep.subr.mxu0 0.0
        %309 = vmatpush1.msra.mxu0 0.0
        %310 = vmatprep.subr.mxu0 0.0
        %311 = vmatpush1.msra.mxu0 0.0
        %312 = vmatprep.subr.mxu0 0.0
        %313 = vmatpush1.msra.mxu0 0.0
        %314 = vmatprep.subr.mxu0 0.0
        %315 = vmatpush1.msra.mxu0 0.0
        %316 = vmatprep.subr.mxu0 0.0
        %317 = vmatpush1.msra.mxu0 0.0
        %318 = vmatprep.subr.mxu0 0.0
        %319 = vmatpush1.msra.mxu0 0.0
        %320 = vmatprep.subr.mxu0 0.0
        %321 = vmatpush1.msra.mxu0 0.0
        %322 = vmatprep.subr.mxu0 0.0
        %323 = vmatpush1.msra.mxu0 0.0
        %324 = vmatprep.subr.mxu0 0.0
        %325 = vmatpush1.msra.mxu0 0.0
        %326 = vmatprep.subr.mxu0 0.0
        %327 = vmatpush1.msra.mxu0 0.0
        %328 = vmatprep.subr.mxu0 0.0
        %329 = vmatpush1.msra.mxu0 0.0
        %330 = vmatprep.subr.mxu0 0.0
        %331 = vmatpush1.msra.mxu0 0.0
        %332 = vmatprep.subr.mxu0 0.0
        %333 = vmatpush1.msra.mxu0 0.0
        %334 = vmatprep.subr.mxu0 0.0
        %335 = vmatpush1.msra.mxu0 0.0
        %336 = vmatprep.subr.mxu0 0.0
        %337 = vmatpush1.msra.mxu0 0.0
        %338 = vmatprep.subr.mxu0 0.0
        %339 = vmatpush1.msra.mxu0 0.0
        %340 = vmatprep.subr.mxu0 0.0
        %341 = vmatpush1.msra.mxu0 0.0
        %342 = vmatprep.mubr.f32.mxu0 0.0
        %343 = vmatmul.mubr.f32.gmra.mrb[0].mxu0 %v276
        %v344 = vpop.f32.mrb[0].mxu0
        %v345 = vadd.f32 0.0, %v344
        %v346 = vpop.f32.mrb[0].mxu0
        %347 = vdwg.mxu0
        %v348 = vmul.f32 %v270, %v270
        %v349 = vsel %vm255, %v348, 0.0
        %350 = vadd.xlane.f32.xlu0 %v349
        %v351 = vpop.xlane.xlu0 %350
        %v352 = vadd.f32 %v351, 1.0
        %v353 = vmul.f32 %v345, 2.0
        %v354 = vsub.f32 %v352, %v353
        %v355 = vmax.f32 %v354, 0.0
        %v356 = vsub.f32 0.0, %v355
        %357 = vst [vmem:[%s245] sm:$0xff] %v356
        %358 = vmax.xlane.f32.xlu0 %v356
        %v359 = vpop.xlane.xlu0 %358
        %v360 = vsub.f32 %v356, %v359
        %v361 = vmul.f32 %v360, 1.442695
        %v362 = vpow.pop %v361
        %v363 = vld [vmem:[#allocation7] sm:$0xff]
        %v364 = vld [vmem:[#allocation7 + $0x8] sm:$0xff]
        %v365 = vld [vmem:[#allocation7 + $0x10] sm:$0xff]
        %v366 = vld [vmem:[#allocation7 + $0x18] sm:$0xff]
        %v367 = vld [vmem:[#allocation7 + $0x20] sm:$0xff]
        %v368 = vld [vmem:[#allocation7 + $0x28] sm:$0xff]
        %v369 = vld [vmem:[#allocation7 + $0x30] sm:$0xff]
        %v370 = vld [vmem:[#allocation7 + $0x38] sm:$0xff]
        %v371 = vld [vmem:[#allocation7 + $0x40] sm:$0xff]
        %v372 = vld [vmem:[#allocation7 + $0x48] sm:$0xff]
        %v373 = vld [vmem:[#allocation7 + $0x50] sm:$0xff]
        %v374 = vld [vmem:[#allocation7 + $0x58] sm:$0xff]
        %v375 = vld [vmem:[#allocation7 + $0x60] sm:$0xff]
        %v376 = vld [vmem:[#allocation7 + $0x68] sm:$0xff]
        %v377 = vld [vmem:[#allocation7 + $0x70] sm:$0xff]
        %v378 = vld [vmem:[#allocation7 + $0x78] sm:$0xff]
        %v379 = vmul.f32 %v356, %v362
        %380 = vmatprep.subr.mxu0 0.0
        %381 = vmatpush1.msra.mxu0 %v363
        %382 = vmatprep.subr.mxu0 0.0
        %383 = vmatpush1.msra.mxu0 %v364
        %384 = vmatprep.subr.mxu0 0.0
        %385 = vmatpush1.msra.mxu0 %v365
        %386 = vmatprep.subr.mxu0 0.0
        %387 = vmatpush1.msra.mxu0 %v366
        %388 = vmatprep.subr.mxu0 0.0
        %389 = vmatpush1.msra.mxu0 %v367
        %390 = vmatprep.subr.mxu0 0.0
        %391 = vmatpush1.msra.mxu0 %v368
        %392 = vmatprep.subr.mxu0 0.0
        %393 = vmatpush1.msra.mxu0 %v369
        %394 = vmatprep.subr.mxu0 0.0
        %395 = vmatpush1.msra.mxu0 %v370
        %396 = vmatprep.subr.mxu0 0.0
        %397 = vmatpush1.msra.mxu0 %v371
        %398 = vmatprep.subr.mxu0 0.0
        %399 = vmatpush1.msra.mxu0 %v372
        %400 = vmatprep.subr.mxu0 0.0
        %401 = vmatpush1.msra.mxu0 %v373
        %402 = vmatprep.subr.mxu0 0.0
        %403 = vmatpush1.msra.mxu0 %v374
        %404 = vmatprep.subr.mxu0 0.0
        %405 = vmatpush1.msra.mxu0 %v375
        %406 = vmatprep.subr.mxu0 0.0
        %407 = vmatpush1.msra.mxu0 %v376
        %408 = vmatprep.subr.mxu0 0.0
        %409 = vmatpush1.msra.mxu0 %v377
        %410 = vmatprep.subr.mxu0 0.0
        %411 = vmatpush1.msra.mxu0 %v378
        %412 = vmatprep.subr.mxu0 0.0
        %413 = vmatpush1.msra.mxu0 0.0
        %414 = vmatprep.subr.mxu0 0.0
        %415 = vmatpush1.msra.mxu0 0.0
        %416 = vmatprep.subr.mxu0 0.0
        %417 = vmatpush1.msra.mxu0 0.0
        %418 = vmatprep.subr.mxu0 0.0
        %419 = vmatpush1.msra.mxu0 0.0
        %420 = vmatprep.subr.mxu0 0.0
        %421 = vmatpush1.msra.mxu0 0.0
        %422 = vmatprep.subr.mxu0 0.0
        %423 = vmatpush1.msra.mxu0 0.0
        %424 = vmatprep.subr.mxu0 0.0
        %425 = vmatpush1.msra.mxu0 0.0
        %426 = vmatprep.subr.mxu0 0.0
        %427 = vmatpush1.msra.mxu0 0.0
        %428 = vmatprep.subr.mxu0 0.0
        %429 = vmatpush1.msra.mxu0 0.0
        %430 = vmatprep.subr.mxu0 0.0
        %431 = vmatpush1.msra.mxu0 0.0
        %432 = vmatprep.subr.mxu0 0.0
        %433 = vmatpush1.msra.mxu0 0.0
        %434 = vmatprep.subr.mxu0 0.0
        %435 = vmatpush1.msra.mxu0 0.0
        %436 = vmatprep.subr.mxu0 0.0
        %437 = vmatpush1.msra.mxu0 0.0
        %438 = vmatprep.subr.mxu0 0.0
        %439 = vmatpush1.msra.mxu0 0.0
        %440 = vmatprep.subr.mxu0 0.0
        %441 = vmatpush1.msra.mxu0 0.0
        %442 = vmatprep.subr.mxu0 0.0
        %443 = vmatpush1.msra.mxu0 0.0
        %444 = vmatprep.mubr.f32.mxu0 0.0
        %445 = vmatmul.mubr.f32.gmra.mrb[0].mxu0 %v379
        %v446 = vpop.f32.mrb[0].mxu0
        %v447 = vadd.f32 0.0, %v446
        %v448 = vpop.f32.mrb[0].mxu0
        %449 = vdwg.mxu0
        %450 = vmatprep.subr.mxu0 0.0
        %451 = vmatpush1.msra.mxu0 %v363
        %452 = vmatprep.subr.mxu0 0.0
        %453 = vmatpush1.msra.mxu0 %v364
        %454 = vmatprep.subr.mxu0 0.0
        %455 = vmatpush1.msra.mxu0 %v365
        %456 = vmatprep.subr.mxu0 0.0
        %457 = vmatpush1.msra.mxu0 %v366
        %458 = vmatprep.subr.mxu0 0.0
        %459 = vmatpush1.msra.mxu0 %v367
        %460 = vmatprep.subr.mxu0 0.0
        %461 = vmatpush1.msra.mxu0 %v368
        %462 = vmatprep.subr.mxu0 0.0
        %463 = vmatpush1.msra.mxu0 %v369
        %464 = vmatprep.subr.mxu0 0.0
        %465 = vmatpush1.msra.mxu0 %v370
        %466 = vmatprep.subr.mxu0 0.0
        %467 = vmatpush1.msra.mxu0 %v371
        %468 = vmatprep.subr.mxu0 0.0
        %469 = vmatpush1.msra.mxu0 %v372
        %470 = vmatprep.subr.mxu0 0.0
        %471 = vmatpush1.msra.mxu0 %v373
        %472 = vmatprep.subr.mxu0 0.0
        %473 = vmatpush1.msra.mxu0 %v374
        %474 = vmatprep.subr.mxu0 0.0
        %475 = vmatpush1.msra.mxu0 %v375
        %476 = vmatprep.subr.mxu0 0.0
        %477 = vmatpush1.msra.mxu0 %v376
        %478 = vmatprep.subr.mxu0 0.0
        %479 = vmatpush1.msra.mxu0 %v377
        %480 = vmatprep.subr.mxu0 0.0
        %481 = vmatpush1.msra.mxu0 %v378
        %482 = vmatprep.subr.mxu0 0.0
        %483 = vmatpush1.msra.mxu0 0.0
        %484 = vmatprep.subr.mxu0 0.0
        %485 = vmatpush1.msra.mxu0 0.0
        %486 = vmatprep.subr.mxu0 0.0
        %487 = vmatpush1.msra.mxu0 0.0
        %488 = vmatprep.subr.mxu0 0.0
        %489 = vmatpush1.msra.mxu0 0.0
        %490 = vmatprep.subr.mxu0 0.0
        %491 = vmatpush1.msra.mxu0 0.0
        %492 = vmatprep.subr.mxu0 0.0
        %493 = vmatpush1.msra.mxu0 0.0
        %494 = vmatprep.subr.mxu0 0.0
        %495 = vmatpush1.msra.mxu0 0.0
        %496 = vmatprep.subr.mxu0 0.0
        %497 = vmatpush1.msra.mxu0 0.0
        %498 = vmatprep.subr.mxu0 0.0
        %499 = vmatpush1.msra.mxu0 0.0
        %500 = vmatprep.subr.mxu0 0.0
        %501 = vmatpush1.msra.mxu0 0.0
        %502 = vmatprep.subr.mxu0 0.0
        %503 = vmatpush1.msra.mxu0 0.0
        %504 = vmatprep.subr.mxu0 0.0
        %505 = vmatpush1.msra.mxu0 0.0
        %506 = vmatprep.subr.mxu0 0.0
        %507 = vmatpush1.msra.mxu0 0.0
        %508 = vmatprep.subr.mxu0 0.0
        %509 = vmatpush1.msra.mxu0 0.0
        %510 = vmatprep.subr.mxu0 0.0
        %511 = vmatpush1.msra.mxu0 0.0
        %512 = vmatprep.subr.mxu0 0.0
        %513 = vmatpush1.msra.mxu0 0.0
        %514 = vmatprep.mubr.f32.mxu0 0.0
        %515 = vmatmul.mubr.f32.gmra.mrb[0].mxu0 %v362
        %v516 = vpop.f32.mrb[0].mxu0
        %v517 = vadd.f32 1e-30, %v516
        %v518 = vpop.f32.mrb[0].mxu0
        %519 = vdwg.mxu0
        %v520 = vrcp.pop %v517
        %v521 = vmul.f32 %v447, %v520
        %522 = vst [vmem:[%s252] sm:$0xff] %v521
        %s523 = sand.u32 %s102, 1
        %s524 = scalar_lea.sflag [#allocation4], %s523
        %s525 = sand.u32 %s102, 1
        %s526 = smul.addr %s525, 8
        %s527 = scalar_lea.vmem [#allocation8], %s526
        %s528 = sand.u32 %s128, 1
        %s529 = scalar_lea.sflag [#allocation10], %s528
        %s530 = sand.u32 %s128, 1
        %s531 = smul.addr %s530, 8
        %s532 = scalar_lea.vmem [#allocation9], %s531
        // Predicated region
        $region45: #{tpu_custom_call.1} parent=31 // pred_check
          %p533 = pneg %p112
        $region46: #{tpu_custom_call.1} parent=31 // pred_check_branch
          %535 = sbr.rel (%p533) target = $region48
        $region47: #{tpu_custom_call.1} parent=31 // pred_region
          %s537 = ssub.s32 128, 128
          %538 = vsyncadd %s524, %s537
          %s539 = smul.addr %s26, 128
          %s540 = scalar_lea.hbm %s3, %s539
          %s542 = sshll.u32 %s527, 4
          %s543 = int_to_ptr.vmem [resolvable:$true] %s542
          %545 = dma.vmem_to_hbm [thread:$0]  %s543, 128, %s540, %s524
        $region48: #{tpu_custom_call.1} parent=31 // pred_fallthru
          _
        // Predicated region
        $region49: #{tpu_custom_call.1} parent=31 // pred_check
          %p546 = pneg %p138
        $region50: #{tpu_custom_call.1} parent=31 // pred_check_branch
          %548 = sbr.rel (%p546) target = $region52
        $region51: #{tpu_custom_call.1} parent=31 // pred_region
          %s550 = ssub.s32 128, 128
          %551 = vsyncadd %s529, %s550
          %s552 = smul.addr %s26, 128
          %s553 = scalar_lea.hbm %s4, %s552
          %s555 = sshll.u32 %s532, 4
          %s556 = int_to_ptr.vmem [resolvable:$true] %s555
          %558 = dma.vmem_to_hbm [thread:$0]  %s556, 128, %s553, %s529
        $region52: #{tpu_custom_call.1} parent=31 // pred_fallthru
          _
      $region32: #{tpu_custom_call.1} parent=5 // pred_fallthru
        _
      %p559 = scmp.le.s32.totalorder 2, %s21
      // Predicated region
      $region53: #{tpu_custom_call.1} parent=5 // pred_check
        %p560 = pneg %p559
      $region54: #{tpu_custom_call.1} parent=5 // pred_check_branch
        %562 = sbr.rel (%p560) target = $region56
      $region55: #{tpu_custom_call.1} parent=5 // pred_region
        %s563 = ssub.s32 %s21, 2
        // Predicated region
        $region57: #{tpu_custom_call.1} parent=55 // pred_check
          %p564 = pneg %p118
        $region58: #{tpu_custom_call.1} parent=55 // pred_check_branch
          %566 = sbr.rel (%p564) target = $region60
        $region59: #{tpu_custom_call.1} parent=55 // pred_region
          %s567 = sand.u32 %s103, 1
          %s568 = scalar_lea.sflag [#allocation4], %s567
          %s569 = sand.u32 %s103, 1
          %s570 = smul.addr %s569, 8
          %s571 = scalar_lea.vmem [#allocation8], %s570
          %572 = dma.done %s568, 128
        $region60: #{tpu_custom_call.1} parent=55 // pred_fallthru
          _
        // Predicated region
        $region61: #{tpu_custom_call.1} parent=55 // pred_check
          %p573 = pneg %p144
        $region62: #{tpu_custom_call.1} parent=55 // pred_check_branch
          %575 = sbr.rel (%p573) target = $region64
        $region63: #{tpu_custom_call.1} parent=55 // pred_region
          %s576 = sand.u32 %s129, 1
          %s577 = scalar_lea.sflag [#allocation10], %s576
          %s578 = sand.u32 %s129, 1
          %s579 = smul.addr %s578, 8
          %s580 = scalar_lea.vmem [#allocation9], %s579
          %581 = dma.done %s577, 128
        $region64: #{tpu_custom_call.1} parent=55 // pred_fallthru
          _
      $region56: #{tpu_custom_call.1} parent=5 // pred_fallthru
        _
    $region6: #{tpu_custom_call.1} parent=1 // loop_footer
      %s25 = sadd.s32 1, %s21
    $region7: #{tpu_custom_call.1} parent=1 // loop_footer_branch
      %20 = sbr.rel target = $region3
    $region8: #{tpu_custom_call.1} parent=1 // loop_exit
      _
    %582 = vsyncpa [#allocation3], 1
    %s583 = scalar_lea.sflag [#allocation3], 1
    %584 = vsyncpa %s583, 1
    %585 = vsyncpa [#allocation6], 1
    %586 = vsyncpa [#allocation4], 1
    %s587 = scalar_lea.sflag [#allocation4], 1
    %588 = vsyncpa %s587, 1
    %589 = vsyncpa [#allocation10], 1
    %s590 = scalar_lea.sflag [#allocation10], 1
    %591 = vsyncpa %s590, 1

</llo_original>
